<compile_context>
chip_gen: v5e
topology: v5e:2x2
jax: 0.10.0
libtpu: 0.0.40
codegen_flags: <defaults>
</compile_context>

<pallas_src>
import jax
import jax.numpy as jnp
from jax import lax
from jax.experimental import pallas as pl
from jax.experimental.pallas import tpu as pltpu


# ------------------------------ tiling helpers ------------------------------ #
def _fit(n, cap, align):
    """Largest divisor of n that is a multiple of `align` and <= cap.
    Returns n itself if n <= cap, or n (full dim) if nothing fits."""
    if n <= cap:
        return n
    t = (cap // align) * align
    while t >= align:
        if n % t == 0:
            return t
        t -= align
    return n


def _fit_pref(n, cap, aligns):
    """Like _fit, but tries alignments in preference order (e.g. 256 before 128)."""
    if n <= cap:
        return n
    for align in aligns:
        t = (cap // align) * align
        while t >= align:
            if n % t == 0:
                return t
            t -= align
    return n


def _vmem_limit(est_bytes):
    """Scoped-VMEM request: >= default, with headroom, < v7x physical (64 MiB)."""
    return int(min(max(2 * est_bytes, 32 * 1024 * 1024), 60 * 1024 * 1024))


# ------------------------------- tiled linear ------------------------------- #
def _make_linear_kernel(has_bias):
    if has_bias:
        def kernel(x_ref, w_ref, b_ref, o_ref, acc_ref):
            @pl.when(pl.program_id(2) == 0)
            def _():
                acc_ref[...] = jnp.zeros_like(acc_ref)

            # Cast the x tile to bf16 here (fuses the fp32->bf16 cast of the
            # activation into the matmul; no extra HBM pass in the wrapper).
            acc_ref[...] += jnp.dot(x_ref[...].astype(jnp.bfloat16), w_ref[...],
                                    preferred_element_type=jnp.float32)

            @pl.when(pl.program_id(2) == pl.num_programs(2) - 1)
            def _():
                o_ref[...] = (acc_ref[...] + b_ref[...]).astype(o_ref.dtype)
    else:
        def kernel(x_ref, w_ref, o_ref, acc_ref):
            @pl.when(pl.program_id(2) == 0)
            def _():
                acc_ref[...] = jnp.zeros_like(acc_ref)

            acc_ref[...] += jnp.dot(x_ref[...].astype(jnp.bfloat16), w_ref[...],
                                    preferred_element_type=jnp.float32)

            @pl.when(pl.program_id(2) == pl.num_programs(2) - 1)
            def _():
                o_ref[...] = acc_ref[...].astype(o_ref.dtype)
    return kernel


def linear(x2d, w, b, out_dtype, *, tm_cap=512, tn_cap=512, tk_cap=1024):
    """y = x2d @ w (+ b).  w in bf16, x cast to bf16 per tile, fp32 accumulation."""
    M, K = x2d.shape
    K2, Nout = w.shape
    assert K == K2
    tm = _fit(M, tm_cap, 16)                       # bf16 sublane alignment
    tn = _fit_pref(Nout, tn_cap, (256, 128))       # full MXU width on v6e/v7x
    tk = _fit_pref(K, tk_cap, (256, 128))
    grid = (M // tm, Nout // tn, K // tk)

    has_bias = b is not None
    kernel = _make_linear_kernel(has_bias)

    in_specs = [
        pl.BlockSpec((tm, tk), lambda i, j, k: (i, k)),
        pl.BlockSpec((tk, tn), lambda i, j, k: (k, j)),
    ]
    operands = [x2d, w]
    vmem_est = (2 * tm * tk * x2d.dtype.itemsize            # x (double-buffered)
                + 2 * tk * tn * w.dtype.itemsize            # w
                + 2 * tm * tn * jnp.dtype(out_dtype).itemsize   # out
                + tm * tn * 4)                               # fp32 accumulator
    if has_bias:
        in_specs.append(pl.BlockSpec((1, tn), lambda i, j, k: (0, j)))
        operands.append(b.reshape(1, Nout).astype(jnp.float32))
        vmem_est += 2 * tn * 4

    return pl.pallas_call(
        kernel,
        out_shape=jax.ShapeDtypeStruct((M, Nout), out_dtype),
        grid_spec=pltpu.PrefetchScalarGridSpec(
            num_scalar_prefetch=0,
            grid=grid,
            in_specs=in_specs,
            out_specs=pl.BlockSpec((tm, tn), lambda i, j, k: (i, j)),
            scratch_shapes=[pltpu.VMEM((tm, tn), jnp.float32)],
        ),
        compiler_params=pltpu.CompilerParams(
            dimension_semantics=("parallel", "parallel", "arbitrary"),
            vmem_limit_bytes=_vmem_limit(vmem_est)),
    )(*operands)


# --------------------------- flash attention kernel ------------------------- #
def _make_flash_kernel(Tk, n_kv):
    """Kernel sees q (Tq, D), k/v (N, D) — K/V for the whole head stay resident
    in VMEM; the kv loop runs inside the kernel with fp32 online softmax."""

    def kernel(q_ref, k_ref, v_ref, o_ref, m_sc, l_sc, acc_sc):
        m_sc[...] = jnp.full_like(m_sc, -jnp.inf)
        l_sc[...] = jnp.zeros_like(l_sc)
        acc_sc[...] = jnp.zeros_like(acc_sc)

        q = q_ref[...]                                   # (Tq, D) bf16, pre-scaled

        def body(i, carry):
            start = pl.multiple_of(i * Tk, Tk)
            k = k_ref[pl.ds(start, Tk), :]               # (Tk, D) bf16
            v = v_ref[pl.ds(start, Tk), :]               # (Tk, D) bf16

            # Scores in fp32; contract the D axes directly (no explicit k.T).
            s = lax.dot_general(q, k, (((1,), (1,)), ((), ())),
                                preferred_element_type=jnp.float32)   # (Tq, Tk)

            m_prev = m_sc[...]
            m_new = jnp.maximum(m_prev, jnp.max(s, axis=-1, keepdims=True))
            alpha = jnp.exp(m_prev - m_new)
            p = jnp.exp(s - m_new)                       # fp32 exp (v5e-safe)
            l_sc[...] = alpha * l_sc[...] + jnp.sum(p, axis=-1, keepdims=True)
            acc_sc[...] = alpha * acc_sc[...] + jnp.dot(
                p.astype(v.dtype), v, preferred_element_type=jnp.float32)
            m_sc[...] = m_new
            return carry

        lax.fori_loop(0, n_kv, body, 0)

        # Exact division once per q tile (negligible cost outside the kv loop).
        o_ref[...] = (acc_sc[...] / l_sc[...]).astype(o_ref.dtype)

    return kernel


def flash_mha(qkv2d, *, B, N, H, D, tq_cap=512, tk_cap=512):
    """qkv2d: (B*N, 3C) bf16 with columns laid out as (3, H, D); the softmax
    scale is already folded into the q columns.  Returns o2d: (B*N, C) bf16
    (the (B, N, H, D) -> (B, N, C) merge is done by the output BlockSpec)."""
    C = H * D
    Tq = _fit(N, tq_cap, 16)
    Tk = _fit(N, tk_cap, 128)            # inner kv slice (lane dim of the score matrix)
    nq, n_kv = N // Tq, N // Tk
    kernel = _make_flash_kernel(Tk, n_kv)

    scratch = [
        pltpu.VMEM((Tq, 1), jnp.float32),     # running max
        pltpu.VMEM((Tq, 1), jnp.float32),     # running denom
        pltpu.VMEM((Tq, D), jnp.float32),     # output accumulator
    ]
    vmem_est = (2 * Tq * D * 2                 # q (double-buffered, bf16)
                + 2 * 2 * N * D * 2            # resident K and V (double-buffered)
                + 2 * Tq * D * 2               # out
                + Tq * D * 4 + 2 * Tq * 4      # scratch
                + 2 * Tq * Tk * 4)             # fp32 score / p temporaries

    compiler_params = pltpu.CompilerParams(
        dimension_semantics=("parallel", "parallel", "parallel"),
        vmem_limit_bytes=_vmem_limit(vmem_est))

    if D % 128 == 0:
        # Fused path: per-head q/k/v column slices are read straight out of the
        # (B*N, 3C) qkv buffer (no HBM transposes).  The K/V index_maps do not
        # depend on qi, so the blocks stay resident across the whole q sweep.
        # TODO(synk): a head-major qkv layout (3H, B*N, D) would make the K/V
        # DMAs fully contiguous instead of 2*D-byte strided row segments.
        return pl.pallas_call(
            kernel,
            out_shape=jax.ShapeDtypeStruct((B * N, C), jnp.bfloat16),
            grid_spec=pltpu.PrefetchScalarGridSpec(
                num_scalar_prefetch=0,
                grid=(B, H, nq),
                in_specs=[
                    pl.BlockSpec((Tq, D), lambda b, h, qi: (b * nq + qi, h)),
                    pl.BlockSpec((N, D), lambda b, h, qi: (b, H + h)),
                    pl.BlockSpec((N, D), lambda b, h, qi: (b, 2 * H + h)),
                ],
                out_specs=pl.BlockSpec((Tq, D), lambda b, h, qi: (b * nq + qi, h)),
                scratch_shapes=scratch,
            ),
            compiler_params=compiler_params,
        )(qkv2d, qkv2d, qkv2d)   # same buffer, three read-only views

    # TODO(synk): head_dim not a multiple of 128 cannot use per-head column
    # blocks of the fused qkv buffer (lane constraint); fall back to an explicit
    # (B, H, N, D) layout (costs one XLA transpose each way).
    qkv = jnp.transpose(qkv2d.reshape(B, N, 3, H, D), (2, 0, 3, 1, 4))
    q, k, v = qkv[0], qkv[1], qkv[2]
    o = pl.pallas_call(
        kernel,
        out_shape=jax.ShapeDtypeStruct((B, H, N, D), jnp.bfloat16),
        grid_spec=pltpu.PrefetchScalarGridSpec(
            num_scalar_prefetch=0,
            grid=(B, H, nq),
            in_specs=[
                pl.BlockSpec((None, None, Tq, D), lambda b, h, qi: (b, h, qi, 0)),
                pl.BlockSpec((None, None, N, D), lambda b, h, qi: (b, h, 0, 0)),
                pl.BlockSpec((None, None, N, D), lambda b, h, qi: (b, h, 0, 0)),
            ],
            out_specs=pl.BlockSpec((None, None, Tq, D),
                                   lambda b, h, qi: (b, h, qi, 0)),
            scratch_shapes=scratch,
        ),
        compiler_params=compiler_params,
    )(q, k, v)
    return jnp.transpose(o, (0, 2, 1, 3)).reshape(B * N, C)


# -------------------------------- parameters -------------------------------- #
class FlashAttentionParams:
    def __init__(self, dim, num_heads, key):
        assert dim % num_heads == 0
        self.dim = dim
        self.num_heads = num_heads
        self.head_dim = dim // num_heads
        self.scale = self.head_dim ** (-0.5)
        k1, k2, k3 = jax.random.split(key, 3)
        # PyTorch Linear stores W as (out, in); we store (in, out) so kernels do
        # x @ W.  The softmax scale is folded into the q columns BEFORE the bf16
        # cast, so the attention kernel never multiplies q by the scale.
        qkv_w = jax.random.normal(k1, (dim, 3 * dim), jnp.float32) * 0.05
        qkv_w = qkv_w.at[:, :dim].multiply(self.scale)
        self.qkv_w = qkv_w.astype(jnp.bfloat16)
        # qkv_bias=False -> no bias operand for the qkv projection at all.
        self.proj_w = (jax.random.normal(k2, (dim, dim), jnp.float32) * 0.05
                       ).astype(jnp.bfloat16)
        self.proj_b = jax.random.normal(k3, (dim,), jnp.float32) * 0.01


# -------------------------------- full forward ------------------------------- #
def flash_attention_forward(params, x):
    """x: (B, N, C) float32 -> (B, N, C) float32."""
    B, N, C = x.shape
    H, D = params.num_heads, params.head_dim

    x2d = x.reshape(B * N, C)                                   # fp32; cast fused in kernel
    qkv = linear(x2d, params.qkv_w, None, out_dtype=jnp.bfloat16)   # (B*N, 3C) bf16
    o2d = flash_mha(qkv, B=B, N=N, H=H, D=D)                        # (B*N, C) bf16
    y = linear(o2d, params.proj_w, params.proj_b, out_dtype=x.dtype)  # (B*N, C) f32
    # attn_drop / proj_drop are p=0.0 in eval -> identity.
    return y.reshape(B, N, C)


# --------------------------------- reference --------------------------------- #
def reference_forward(params, x):
    B, N, C = x.shape
    H, D = params.num_heads, params.head_dim
    xb = x.reshape(B * N, C).astype(jnp.bfloat16).astype(jnp.float32)
    wq = params.qkv_w.astype(jnp.float32)          # q columns already carry the scale
    qkv = (xb @ wq).astype(jnp.bfloat16)
    qkv = jnp.transpose(qkv.reshape(B, N, 3, H, D), (2, 0, 3, 1, 4))   # (3,B,H,N,D)
    q = qkv[0].astype(jnp.float32)
    k = qkv[1].astype(jnp.float32)
    v = qkv[2].astype(jnp.float32)
    s = jnp.einsum("bhnd,bhmd->bhnm", q, k)
    m = jnp.max(s, axis=-1, keepdims=True)
    p = jnp.exp(s - m)
    l = jnp.sum(p, axis=-1, keepdims=True)
    o = jnp.einsum("bhnm,bhmd->bhnd",
                   p.astype(jnp.bfloat16).astype(jnp.float32), v) / l
    o = o.astype(jnp.bfloat16)
    o = jnp.transpose(o, (0, 2, 1, 3)).reshape(B * N, C)
    y = o.astype(jnp.float32) @ params.proj_w.astype(jnp.float32) + params.proj_b
    return y.reshape(B, N, C)


if __name__ == "__main__":
    # head_dim = 128 -> exercises the fused (no-transpose), resident-KV path.
    B, N, dim, num_heads = 2, 128, 256, 2
    key = jax.random.PRNGKey(0)
    kx, kp = jax.random.split(key)
    x = jax.random.normal(kx, (B, N, dim), jnp.float32)
    params = FlashAttentionParams(dim, num_heads, kp)

    out = jax.block_until_ready(flash_attention_forward(params, x))
    ref = reference_forward(params, x)

    assert out.shape == (B, N, dim)
    max_err = float(jnp.max(jnp.abs(out - ref)))
    assert jnp.allclose(out, ref, atol=2e-2, rtol=2e-2), \
        f"mismatch vs reference (max abs err {max_err})"

    print("KERNEL_OK")
</pallas_src>

<mosaic_0001>
module attributes {stable_mosaic.version = 11 : i64} {
  func.func @kernel(%arg0: i32, %arg1: i32, %arg2: i32, %arg3: memref<256x256xf32, #tpu.memory_space<vmem>>, %arg4: memref<256x256xbf16, #tpu.memory_space<vmem>>, %arg5: memref<256x256xbf16, #tpu.memory_space<vmem>>, %arg6: memref<256x256xf32, #tpu.memory_space<vmem>>) attributes {dimension_semantics = [#tpu.dimension_semantics<parallel>, #tpu.dimension_semantics<parallel>, #tpu.dimension_semantics<arbitrary>], iteration_bounds = array<i64: 1, 3, 1>, scalar_prefetch = 0 : i64, scratch_operands = 1 : i64, tpu.core_type = #tpu.core_type<tc>, window_params = [{transform_indices = @transform_0, window_bounds = array<i64: 256, 256>}, {transform_indices = @transform_1, window_bounds = array<i64: 256, 256>}, {transform_indices = @transform_2, window_bounds = array<i64: 256, 256>}]} {
    %c0_i32 = arith.constant 0 : i32
    %0 = arith.cmpi eq, %arg2, %c0_i32 : i32
    %1 = arith.extui %0 : i1 to i32
    %c0_i32_0 = arith.constant 0 : i32
    %2 = arith.cmpi ne, %1, %c0_i32_0 : i32
    scf.if %2 {
      %cst_10 = arith.constant 0.000000e+00 : f32
      %13 = vector.broadcast %cst_10 : f32 to vector<256x256xf32>
      %c0_11 = arith.constant 0 : index
      %c0_12 = arith.constant 0 : index
      %14 = vector.load %arg6[%c0_11, %c0_12] : memref<256x256xf32, #tpu.memory_space<vmem>>, vector<256x256xf32>
      tpu.vector_store %arg6[%c0_11, %c0_12], %13 {strides = array<i32>} : memref<256x256xf32, #tpu.memory_space<vmem>>, vector<256x256xf32>,
    } else {
    }
    %c0 = arith.constant 0 : index
    %c0_1 = arith.constant 0 : index
    %3 = vector.load %arg6[%c0, %c0_1] : memref<256x256xf32, #tpu.memory_space<vmem>>, vector<256x256xf32>
    %c0_2 = arith.constant 0 : index
    %c0_3 = arith.constant 0 : index
    %4 = vector.load %arg3[%c0_2, %c0_3] : memref<256x256xf32, #tpu.memory_space<vmem>>, vector<256x256xf32>
    %5 = arith.truncf %4 : vector<256x256xf32> to vector<256x256xbf16>
    %c0_4 = arith.constant 0 : index
    %c0_5 = arith.constant 0 : index
    %6 = vector.load %arg4[%c0_4, %c0_5] : memref<256x256xbf16, #tpu.memory_space<vmem>>, vector<256x256xbf16>
    %cst = arith.constant dense<0.000000e+00> : vector<256x256xf32>
    %7 = tpu.matmul %5, %6, %cst {dimension_numbers = #tpu.dot_dimension_numbers<[1], [0], [0], [1], [0, 0, 1, 1], [], []>} : vector<256x256xbf16>, vector<256x256xbf16>, vector<256x256xf32> -> vector<256x256xf32>
    %8 = arith.addf %3, %7 : vector<256x256xf32>
    %c0_6 = arith.constant 0 : index
    %c0_7 = arith.constant 0 : index
    %9 = vector.load %arg6[%c0_6, %c0_7] : memref<256x256xf32, #tpu.memory_space<vmem>>, vector<256x256xf32>
    tpu.vector_store %arg6[%c0_6, %c0_7], %8 {strides = array<i32>} : memref<256x256xf32, #tpu.memory_space<vmem>>, vector<256x256xf32>,
    %c0_i32_8 = arith.constant 0 : i32
    %10 = arith.cmpi eq, %arg2, %c0_i32_8 : i32
    %11 = arith.extui %10 : i1 to i32
    %c0_i32_9 = arith.constant 0 : i32
    %12 = arith.cmpi ne, %11, %c0_i32_9 : i32
    scf.if %12 {
      %c0_10 = arith.constant 0 : index
      %c0_11 = arith.constant 0 : index
      %13 = vector.load %arg6[%c0_10, %c0_11] : memref<256x256xf32, #tpu.memory_space<vmem>>, vector<256x256xf32>
      %14 = arith.truncf %13 : vector<256x256xf32> to vector<256x256xbf16>
      %c0_12 = arith.constant 0 : index
      %c0_13 = arith.constant 0 : index
      %15 = vector.load %arg5[%c0_12, %c0_13] : memref<256x256xbf16, #tpu.memory_space<vmem>>, vector<256x256xbf16>
      tpu.vector_store %arg5[%c0_12, %c0_13], %14 {strides = array<i32>} : memref<256x256xbf16, #tpu.memory_space<vmem>>, vector<256x256xbf16>,
    } else {
    }
    return
  }
  func.func @transform_0(%arg0: i32, %arg1: i32, %arg2: i32) -> (i32, i32) {
    %c0_i32 = arith.constant 0 : i32
    return %arg0, %arg2 : i32, i32
  }
  func.func @transform_1(%arg0: i32, %arg1: i32, %arg2: i32) -> (i32, i32) {
    %c0_i32 = arith.constant 0 : i32
    return %arg2, %arg1 : i32, i32
  }
  func.func @transform_2(%arg0: i32, %arg1: i32, %arg2: i32) -> (i32, i32) {
    %c0_i32 = arith.constant 0 : i32
    return %arg0, %arg1 : i32, i32
  }
}

</mosaic_0001>

<llo_original>
// kernel: tpu_custom_call.1
$region0: #{tpu_custom_call.1}
  #allocation0 [shape = 'u32[]', space=smem, size = 0x4, offset = 0x4, fixed_abs, tag = 'smem constant byte address 0x4 - core index']
  #allocation1 [shape = 'u32[72,128]{1,0:T(1,128)}', space=vmem, size = 0x9000, scoped, tag = 'internal scratch']
  #allocation2 [shape = 'f32[256,256]{1,0:T(8,128)}', space=vmem, size = 0x40000, scoped, tag = 'scratch operand']
  %s0 = inlined_call_operand.hbm [shape: f32[256,256], index: 0, kind: input, shape index: {}]
  %s1 = inlined_call_operand.hbm [shape: bf16[256,768], index: 1, kind: input, shape index: {}]
  %s2 = inlined_call_operand.hbm [shape: bf16[256,768], index: 2, kind: output, shape index: {}]
  %s3 = sld [smem:[#allocation0]]
  $region57: #{tpu_custom_call.1} parent=0
    _
  %s5 = ssub.s32 1, %s3
  %s6 = scalar_select 0, %s5, %s3
  $region1: #{tpu_custom_call.1} parent=0
    #allocation3 [shape = 'u8[262144]{0}', space=vmem, size = 0x40000, scoped, tag = 'input window, operand 0, single buffered']
    #allocation4 [shape = 's32[2]{0}', space=sflag, size = 0x8, scoped, tag = 'scoped memory for tpu_custom_call.1']
    #allocation5 [shape = 's32[2]{0}', space=sflag, size = 0x8, scoped, tag = 'scoped memory for tpu_custom_call.1']
    #allocation6 [shape = 'u8[262144]{0}', space=vmem, size = 0x40000, scoped, tag = 'input window, operand 1']
    #allocation7 [shape = 's32[2]{0}', space=sflag, size = 0x8, scoped, tag = 'scoped memory for tpu_custom_call.1']
    #allocation8 [shape = 'u8[262144]{0}', space=vmem, size = 0x40000, scoped, tag = 'output window, operand 0']
    %7 = vsyncpa [#allocation4], 0
    %8 = vsyncpa [#allocation7], 0
    %s9 = scalar_lea.sflag [#allocation7], 1
    %10 = vsyncpa %s9, 0
    %11 = vsyncpa [#allocation5], 0
    %s12 = scalar_lea.sflag [#allocation5], 1
    %13 = vsyncpa %s12, 0
    loop: start=0, step=1, limit=5
    $region2: #{tpu_custom_call.1} parent=1 // loop_pre_header
      _
    $region3: #{tpu_custom_call.1} parent=1 // loop_header
      %s15 = sphi 0, %s19
      %p16 = scmp.ge.s32.totalorder %s15, 5
      %s22 = sphi 0, %s41
      %s23 = sphi 0, %s37
      %s24 = sphi 0, %s33
      %s25 = sphi 0, %s22
      %s26 = sphi 0, %s23
      %s27 = sphi 0, %s24
      %s28 = sphi 0, %s25
      %s29 = sphi 0, %s26
      %s30 = sphi 0, %s27
      %s46 = sphi 0, %s48
      %s49 = sphi 0, %s46
      %s50 = sphi 0, %s49
      %s66 = sphi 0, %s50
      %s74 = sphi 0, %s76
      %s77 = sphi 0, %s74
      %s78 = sphi 0, %s77
      %s94 = sphi 0, %s78
      %s102 = sphi 0, %s104
      %s105 = sphi 0, %s102
      %s106 = sphi 0, %s105
      %s122 = sphi 0, %s106
    $region4: #{tpu_custom_call.1} parent=1 // loop_header_branch
      %18 = sbr.rel (%p16) target = $region8
    $region5: #{tpu_custom_call.1} parent=1 // loop_body
      %s20 = ssub.s32 %s15, 1
      %s21 = ssub.s32 %s15, 2
      %s31 = sadd.s32 1, %s24
      %p32 = scmp.ge.s32.totalorder %s31, 1
      %s33 = scalar_select %p32, 0, %s31
      %s34 = sadd.s32 1, %s23
      %s35 = scalar_select %p32, %s34, %s23
      %p36 = scmp.ge.s32.totalorder %s35, 3
      %s37 = scalar_select %p36, 0, %s35
      %s38 = sadd.s32 1, %s22
      %s39 = scalar_select %p36, %s38, %s22
      %p40 = scmp.ge.s32.totalorder %s39, 1
      %s41 = scalar_select %p40, 0, %s39
      %s42 = ssub.s32 %s22, %s41
      %s43 = ssub.s32 %s24, %s33
      %s44 = sor.u32 %s42, %s43
      %p45 = scmp.eq.s32.totalorder %s44, 0
      %s47 = sadd.s32 %s46, 1
      %s48 = scalar_select %p45, %s46, %s47
      %p51 = pneg %p45
      %p52 = scmp.eq.s32.totalorder %s15, 2
      %p53 = por %p51, %p52
      %p54 = scmp.ne.s32.totalorder %s46, %s49
      %p55 = scmp.eq.s32.totalorder %s15, 0
      %p56 = por %p54, %p55
      %p57 = scmp.ne.s32.totalorder %s46, %s49
      %p58 = scmp.eq.s32.totalorder %s20, 2
      %p59 = por %p57, %p58
      %p60 = scmp.ne.s32.totalorder %s49, %s50
      %p61 = scmp.eq.s32.totalorder %s20, 0
      %p62 = por %p60, %p61
      %p63 = scmp.ne.s32.totalorder %s49, %s50
      %p64 = scmp.eq.s32.totalorder %s21, 2
      %p65 = por %p63, %p64
      %p67 = scmp.ne.s32.totalorder %s50, %s66
      %p68 = scmp.eq.s32.totalorder %s21, 0
      %p69 = por %p67, %p68
      %s70 = ssub.s32 %s24, %s33
      %s71 = ssub.s32 %s23, %s37
      %s72 = sor.u32 %s70, %s71
      %p73 = scmp.eq.s32.totalorder %s72, 0
      %s75 = sadd.s32 %s74, 1
      %s76 = scalar_select %p73, %s74, %s75
      %p79 = pneg %p73
      %p80 = scmp.eq.s32.totalorder %s15, 2
      %p81 = por %p79, %p80
      %p82 = scmp.ne.s32.totalorder %s74, %s77
      %p83 = scmp.eq.s32.totalorder %s15, 0
      %p84 = por %p82, %p83
      %p85 = scmp.ne.s32.totalorder %s74, %s77
      %p86 = scmp.eq.s32.totalorder %s20, 2
      %p87 = por %p85, %p86
      %p88 = scmp.ne.s32.totalorder %s77, %s78
      %p89 = scmp.eq.s32.totalorder %s20, 0
      %p90 = por %p88, %p89
      %p91 = scmp.ne.s32.totalorder %s77, %s78
      %p92 = scmp.eq.s32.totalorder %s21, 2
      %p93 = por %p91, %p92
      %p95 = scmp.ne.s32.totalorder %s78, %s94
      %p96 = scmp.eq.s32.totalorder %s21, 0
      %p97 = por %p95, %p96
      %s98 = ssub.s32 %s22, %s41
      %s99 = ssub.s32 %s23, %s37
      %s100 = sor.u32 %s98, %s99
      %p101 = scmp.eq.s32.totalorder %s100, 0
      %s103 = sadd.s32 %s102, 1
      %s104 = scalar_select %p101, %s102, %s103
      %p107 = pneg %p101
      %p108 = scmp.eq.s32.totalorder %s15, 2
      %p109 = por %p107, %p108
      %p110 = scmp.ne.s32.totalorder %s102, %s105
      %p111 = scmp.eq.s32.totalorder %s15, 0
      %p112 = por %p110, %p111
      %p113 = scmp.ne.s32.totalorder %s102, %s105
      %p114 = scmp.eq.s32.totalorder %s20, 2
      %p115 = por %p113, %p114
      %p116 = scmp.ne.s32.totalorder %s105, %s106
      %p117 = scmp.eq.s32.totalorder %s20, 0
      %p118 = por %p116, %p117
      %p119 = scmp.ne.s32.totalorder %s105, %s106
      %p120 = scmp.eq.s32.totalorder %s21, 2
      %p121 = por %p119, %p120
      %p123 = scmp.ne.s32.totalorder %s106, %s122
      %p124 = scmp.eq.s32.totalorder %s21, 0
      %p125 = por %p123, %p124
      %p126 = scmp.le.s32.totalorder 1, %s15
      %p127 = scmp.lt.s32.totalorder %s15, 4
      %p128 = pnand %p126, %p127
      %p129 = pneg %p128
      // Predicated region
      $region9: #{tpu_custom_call.1} parent=5 // pred_check
        _
      $region10: #{tpu_custom_call.1} parent=5 // pred_check_branch
        %131 = sbr.rel (%p128) target = $region12
      $region11: #{tpu_custom_call.1} parent=5 // pred_region
        %s132 = ssub.s32 %s15, 1
        // Predicated region
        $region13: #{tpu_custom_call.1} parent=11 // pred_check
          %p133 = pneg %p62
        $region14: #{tpu_custom_call.1} parent=11 // pred_check_branch
          %135 = sbr.rel (%p133) target = $region16
        $region15: #{tpu_custom_call.1} parent=11 // pred_region
          %s136 = smul.u32 32, %s25
          %s137 = smul.u32 2, %s27
          %139 = vsyncadd [#allocation4], 0
          %s140 = smul.addr %s136, 2
          %s141 = sadd.s32 %s137, %s140
          %s142 = smul.addr %s141, 8
          %s143 = scalar_lea.hbm %s0, %s142
          %s144 = sshll.u32 %s143, 4
          %s145 = int_to_ptr.hbm [resolvable:$true] %s144
          %s146 = sshll.u32 [#allocation3], 4
          %s147 = int_to_ptr.vmem [resolvable:$true] %s146
          %152 = dma.hbm_to_vmem [thread:$0]  %s145, 8192, %s147, [#allocation4], 256, 256, 16
        $region16: #{tpu_custom_call.1} parent=11 // pred_fallthru
          _
      $region12: #{tpu_custom_call.1} parent=5 // pred_fallthru
        _
      %p153 = scmp.lt.s32.totalorder %s15, 3
      // Predicated region
      $region17: #{tpu_custom_call.1} parent=5 // pred_check
        %p154 = pneg %p153
      $region18: #{tpu_custom_call.1} parent=5 // pred_check_branch
        %156 = sbr.rel (%p154) target = $region20
      $region19: #{tpu_custom_call.1} parent=5 // pred_region
        // Predicated region
        $region21: #{tpu_custom_call.1} parent=19 // pred_check
          %p157 = pneg %p84
        $region22: #{tpu_custom_call.1} parent=19 // pred_check_branch
          %159 = sbr.rel (%p157) target = $region24
        $region23: #{tpu_custom_call.1} parent=19 // pred_region
          %s160 = sand.u32 %s74, 1
          %s161 = scalar_lea.sflag [#allocation7], %s160
          %s162 = sand.u32 %s74, 1
          %s163 = smul.addr %s162, 256
          %s164 = scalar_lea.vmem [#allocation6], %s163
          %s165 = smul.u32 32, %s24
          %s166 = smul.u32 2, %s23
          %168 = vsyncadd %s161, 0
          %s169 = smul.addr %s165, 6
          %s170 = sadd.s32 %s166, %s169
          %s171 = smul.addr %s170, 4
          %s172 = scalar_lea.hbm %s1, %s171
          %s173 = sshll.u32 %s172, 4
          %s174 = int_to_ptr.hbm [resolvable:$true] %s173
          %s175 = sshll.u32 %s164, 4
          %s176 = int_to_ptr.vmem [resolvable:$true] %s175
          %181 = dma.hbm_to_vmem [thread:$0]  %s174, 4096, %s176, %s161, 384, 128, 8
        $region24: #{tpu_custom_call.1} parent=19 // pred_fallthru
          _
      $region20: #{tpu_custom_call.1} parent=5 // pred_fallthru
        _
      %p182 = scmp.le.s32.totalorder 1, %s15
      %p183 = scmp.lt.s32.totalorder %s15, 4
      %p184 = pnand %p182, %p183
      %p185 = pneg %p184
      // Predicated region
      $region25: #{tpu_custom_call.1} parent=5 // pred_check
        _
      $region26: #{tpu_custom_call.1} parent=5 // pred_check_branch
        %187 = sbr.rel (%p184) target = $region28
      $region27: #{tpu_custom_call.1} parent=5 // pred_region
        %s188 = ssub.s32 %s15, 1
        // Predicated region
        $region29: #{tpu_custom_call.1} parent=27 // pred_check
          %p189 = pneg %p62
        $region30: #{tpu_custom_call.1} parent=27 // pred_check_branch
          %191 = sbr.rel (%p189) target = $region32
        $region31: #{tpu_custom_call.1} parent=27 // pred_region
          %193 = dma.done [#allocation4], 8192
        $region32: #{tpu_custom_call.1} parent=27 // pred_fallthru
          _
        %s194 = sand.u32 %s77, 1
        %s195 = scalar_lea.sflag [#allocation7], %s194
        %s196 = sand.u32 %s77, 1
        %s197 = smul.addr %s196, 256
        %s198 = scalar_lea.vmem [#allocation6], %s197
        // Predicated region
        $region33: #{tpu_custom_call.1} parent=27 // pred_check
          %p199 = pneg %p90
        $region34: #{tpu_custom_call.1} parent=27 // pred_check_branch
          %201 = sbr.rel (%p199) target = $region36
        $region35: #{tpu_custom_call.1} parent=27 // pred_region
          %203 = dma.done %s195, 4096
        $region36: #{tpu_custom_call.1} parent=27 // pred_fallthru
          _
        %p204 = pneg %p62
        %p205 = pneg %p59
        %s206 = sand.u32 %s77, 1
        %s207 = scalar_lea.sflag [#allocation7], %s206
        %s208 = sand.u32 %s77, 1
        %s209 = smul.addr %s208, 256
        %s210 = scalar_lea.vmem [#allocation6], %s209
        %p211 = pneg %p90
        %p212 = pneg %p87
        %p213 = pneg %p118
        %p214 = pneg %p115
        %s215 = sand.u32 %s105, 1
        %s216 = scalar_lea.sflag [#allocation5], %s215
        %s217 = sand.u32 %s105, 1
        %s218 = smul.addr %s217, 256
        %s219 = scalar_lea.vmem [#allocation8], %s218
        %s220 = smul.u32 32, %s25
        %s221 = smul.u32 2, %s27
        %s222 = smul.u32 32, %s27
        %s223 = smul.u32 2, %s26
        %s224 = smul.u32 32, %s25
        %s225 = smul.u32 2, %s26
        %p226 = scmp.eq.s32.totalorder %s27, 0
        // Predicated region
        $region37: #{tpu_custom_call.1} parent=27 // pred_check
          %p227 = pneg %p226
        $region38: #{tpu_custom_call.1} parent=27 // pred_check_branch
          %229 = sbr.rel (%p227) target = $region40
        $region39: #{tpu_custom_call.1} parent=27 // pred_region
          %230 = vst [vmem:[#allocation2] sm:$0xff] 0.0
          %231 = vst [vmem:[#allocation2 + $0x8] sm:$0xff] 0.0
          %232 = vst [vmem:[#allocation2 + $0x10] sm:$0xff] 0.0
          %233 = vst [vmem:[#allocation2 + $0x18] sm:$0xff] 0.0
          %234 = vst [vmem:[#allocation2 + $0x20] sm:$0xff] 0.0
          %235 = vst [vmem:[#allocation2 + $0x28] sm:$0xff] 0.0
          %236 = vst [vmem:[#allocation2 + $0x30] sm:$0xff] 0.0
          %237 = vst [vmem:[#allocation2 + $0x38] sm:$0xff] 0.0
          %238 = vst [vmem:[#allocation2 + $0x40] sm:$0xff] 0.0
          %239 = vst [vmem:[#allocation2 + $0x48] sm:$0xff] 0.0
          %240 = vst [vmem:[#allocation2 + $0x50] sm:$0xff] 0.0
          %241 = vst [vmem:[#allocation2 + $0x58] sm:$0xff] 0.0
          %242 = vst [vmem:[#allocation2 + $0x60] sm:$0xff] 0.0
          %243 = vst [vmem:[#allocation2 + $0x68] sm:$0xff] 0.0
          %244 = vst [vmem:[#allocation2 + $0x70] sm:$0xff] 0.0
          %245 = vst [vmem:[#allocation2 + $0x78] sm:$0xff] 0.0
          %246 = vst [vmem:[#allocation2 + $0x80] sm:$0xff] 0.0
          %247 = vst [vmem:[#allocation2 + $0x88] sm:$0xff] 0.0
          %248 = vst [vmem:[#allocation2 + $0x90] sm:$0xff] 0.0
          %249 = vst [vmem:[#allocation2 + $0x98] sm:$0xff] 0.0
          %250 = vst [vmem:[#allocation2 + $0xa0] sm:$0xff] 0.0
          %251 = vst [vmem:[#allocation2 + $0xa8] sm:$0xff] 0.0
          %252 = vst [vmem:[#allocation2 + $0xb0] sm:$0xff] 0.0
          %253 = vst [vmem:[#allocation2 + $0xb8] sm:$0xff] 0.0
          %254 = vst [vmem:[#allocation2 + $0xc0] sm:$0xff] 0.0
          %255 = vst [vmem:[#allocation2 + $0xc8] sm:$0xff] 0.0
          %256 = vst [vmem:[#allocation2 + $0xd0] sm:$0xff] 0.0
          %257 = vst [vmem:[#allocation2 + $0xd8] sm:$0xff] 0.0
          %258 = vst [vmem:[#allocation2 + $0xe0] sm:$0xff] 0.0
          %259 = vst [vmem:[#allocation2 + $0xe8] sm:$0xff] 0.0
          %260 = vst [vmem:[#allocation2 + $0xf0] sm:$0xff] 0.0
          %261 = vst [vmem:[#allocation2 + $0xf8] sm:$0xff] 0.0
          %262 = vst [vmem:[#allocation2 + $0x100] sm:$0xff] 0.0
          %263 = vst [vmem:[#allocation2 + $0x108] sm:$0xff] 0.0
          %264 = vst [vmem:[#allocation2 + $0x110] sm:$0xff] 0.0
          %265 = vst [vmem:[#allocation2 + $0x118] sm:$0xff] 0.0
          %266 = vst [vmem:[#allocation2 + $0x120] sm:$0xff] 0.0
          %267 = vst [vmem:[#allocation2 + $0x128] sm:$0xff] 0.0
          %268 = vst [vmem:[#allocation2 + $0x130] sm:$0xff] 0.0
          %269 = vst [vmem:[#allocation2 + $0x138] sm:$0xff] 0.0
          %270 = vst [vmem:[#allocation2 + $0x140] sm:$0xff] 0.0
          %271 = vst [vmem:[#allocation2 + $0x148] sm:$0xff] 0.0
          %272 = vst [vmem:[#allocation2 + $0x150] sm:$0xff] 0.0
          %273 = vst [vmem:[#allocation2 + $0x158] sm:$0xff] 0.0
          %274 = vst [vmem:[#allocation2 + $0x160] sm:$0xff] 0.0
          %275 = vst [vmem:[#allocation2 + $0x168] sm:$0xff] 0.0
          %276 = vst [vmem:[#allocation2 + $0x170] sm:$0xff] 0.0
          %277 = vst [vmem:[#allocation2 + $0x178] sm:$0xff] 0.0
          %278 = vst [vmem:[#allocation2 + $0x180] sm:$0xff] 0.0
          %279 = vst [vmem:[#allocation2 + $0x188] sm:$0xff] 0.0
          %280 = vst [vmem:[#allocation2 + $0x190] sm:$0xff] 0.0
          %281 = vst [vmem:[#allocation2 + $0x198] sm:$0xff] 0.0
          %282 = vst [vmem:[#allocation2 + $0x1a0] sm:$0xff] 0.0
          %283 = vst [vmem:[#allocation2 + $0x1a8] sm:$0xff] 0.0
          %284 = vst [vmem:[#allocation2 + $0x1b0] sm:$0xff] 0.0
          %285 = vst [vmem:[#allocation2 + $0x1b8] sm:$0xff] 0.0
          %286 = vst [vmem:[#allocation2 + $0x1c0] sm:$0xff] 0.0
          %287 = vst [vmem:[#allocation2 + $0x1c8] sm:$0xff] 0.0
          %288 = vst [vmem:[#allocation2 + $0x1d0] sm:$0xff] 0.0
          %289 = vst [vmem:[#allocation2 + $0x1d8] sm:$0xff] 0.0
          %290 = vst [vmem:[#allocation2 + $0x1e0] sm:$0xff] 0.0
          %291 = vst [vmem:[#allocation2 + $0x1e8] sm:$0xff] 0.0
          %292 = vst [vmem:[#allocation2 + $0x1f0] sm:$0xff] 0.0
          %293 = vst [vmem:[#allocation2 + $0x1f8] sm:$0xff] 0.0
        $region40: #{tpu_custom_call.1} parent=27 // pred_fallthru
          _
        %v294 = vld [vmem:[#allocation2] sm:$0xff]
        %v295 = vld [vmem:[#allocation2 + $0x8] sm:$0xff]
        %v296 = vld [vmem:[#allocation2 + $0x10] sm:$0xff]
        %v297 = vld [vmem:[#allocation2 + $0x18] sm:$0xff]
        %v298 = vld [vmem:[#allocation2 + $0x20] sm:$0xff]
        %v299 = vld [vmem:[#allocation2 + $0x28] sm:$0xff]
        %v300 = vld [vmem:[#allocation2 + $0x30] sm:$0xff]
        %v301 = vld [vmem:[#allocation2 + $0x38] sm:$0xff]
        %v302 = vld [vmem:[#allocation2 + $0x40] sm:$0xff]
        %v303 = vld [vmem:[#allocation2 + $0x48] sm:$0xff]
        %v304 = vld [vmem:[#allocation2 + $0x50] sm:$0xff]
        %v305 = vld [vmem:[#allocation2 + $0x58] sm:$0xff]
        %v306 = vld [vmem:[#allocation2 + $0x60] sm:$0xff]
        %v307 = vld [vmem:[#allocation2 + $0x68] sm:$0xff]
        %v308 = vld [vmem:[#allocation2 + $0x70] sm:$0xff]
        %v309 = vld [vmem:[#allocation2 + $0x78] sm:$0xff]
        %v310 = vld [vmem:[#allocation2 + $0x80] sm:$0xff]
        %v311 = vld [vmem:[#allocation2 + $0x88] sm:$0xff]
        %v312 = vld [vmem:[#allocation2 + $0x90] sm:$0xff]
        %v313 = vld [vmem:[#allocation2 + $0x98] sm:$0xff]
        %v314 = vld [vmem:[#allocation2 + $0xa0] sm:$0xff]
        %v315 = vld [vmem:[#allocation2 + $0xa8] sm:$0xff]
        %v316 = vld [vmem:[#allocation2 + $0xb0] sm:$0xff]
        %v317 = vld [vmem:[#allocation2 + $0xb8] sm:$0xff]
        %v318 = vld [vmem:[#allocation2 + $0xc0] sm:$0xff]
        %v319 = vld [vmem:[#allocation2 + $0xc8] sm:$0xff]
        %v320 = vld [vmem:[#allocation2 + $0xd0] sm:$0xff]
        %v321 = vld [vmem:[#allocation2 + $0xd8] sm:$0xff]
        %v322 = vld [vmem:[#allocation2 + $0xe0] sm:$0xff]
        %v323 = vld [vmem:[#allocation2 + $0xe8] sm:$0xff]
        %v324 = vld [vmem:[#allocation2 + $0xf0] sm:$0xff]
        %v325 = vld [vmem:[#allocation2 + $0xf8] sm:$0xff]
        %v326 = vld [vmem:[#allocation2 + $0x100] sm:$0xff]
        %v327 = vld [vmem:[#allocation2 + $0x108] sm:$0xff]
        %v328 = vld [vmem:[#allocation2 + $0x110] sm:$0xff]
        %v329 = vld [vmem:[#allocation2 + $0x118] sm:$0xff]
        %v330 = vld [vmem:[#allocation2 + $0x120] sm:$0xff]
        %v331 = vld [vmem:[#allocation2 + $0x128] sm:$0xff]
        %v332 = vld [vmem:[#allocation2 + $0x130] sm:$0xff]
        %v333 = vld [vmem:[#allocation2 + $0x138] sm:$0xff]
        %v334 = vld [vmem:[#allocation2 + $0x140] sm:$0xff]
        %v335 = vld [vmem:[#allocation2 + $0x148] sm:$0xff]
        %v336 = vld [vmem:[#allocation2 + $0x150] sm:$0xff]
        %v337 = vld [vmem:[#allocation2 + $0x158] sm:$0xff]
        %v338 = vld [vmem:[#allocation2 + $0x160] sm:$0xff]
        %v339 = vld [vmem:[#allocation2 + $0x168] sm:$0xff]
        %v340 = vld [vmem:[#allocation2 + $0x170] sm:$0xff]
        %v341 = vld [vmem:[#allocation2 + $0x178] sm:$0xff]
        %v342 = vld [vmem:[#allocation2 + $0x180] sm:$0xff]
        %v343 = vld [vmem:[#allocation2 + $0x188] sm:$0xff]
        %v344 = vld [vmem:[#allocation2 + $0x190] sm:$0xff]
        %v345 = vld [vmem:[#allocation2 + $0x198] sm:$0xff]
        %v346 = vld [vmem:[#allocation2 + $0x1a0] sm:$0xff]
        %v347 = vld [vmem:[#allocation2 + $0x1a8] sm:$0xff]
        %v348 = vld [vmem:[#allocation2 + $0x1b0] sm:$0xff]
        %v349 = vld [vmem:[#allocation2 + $0x1b8] sm:$0xff]
        %v350 = vld [vmem:[#allocation2 + $0x1c0] sm:$0xff]
        %v351 = vld [vmem:[#allocation2 + $0x1c8] sm:$0xff]
        %v352 = vld [vmem:[#allocation2 + $0x1d0] sm:$0xff]
        %v353 = vld [vmem:[#allocation2 + $0x1d8] sm:$0xff]
        %v354 = vld [vmem:[#allocation2 + $0x1e0] sm:$0xff]
        %v355 = vld [vmem:[#allocation2 + $0x1e8] sm:$0xff]
        %v356 = vld [vmem:[#allocation2 + $0x1f0] sm:$0xff]
        %v357 = vld [vmem:[#allocation2 + $0x1f8] sm:$0xff]
        %v358 = vld [vmem:[#allocation3] sm:$0xff]
        %v359 = vld [vmem:[#allocation3 + $0x8] sm:$0xff]
        %v360 = vld [vmem:[#allocation3 + $0x10] sm:$0xff]
        %v361 = vld [vmem:[#allocation3 + $0x18] sm:$0xff]
        %v362 = vld [vmem:[#allocation3 + $0x20] sm:$0xff]
        %v363 = vld [vmem:[#allocation3 + $0x28] sm:$0xff]
        %v364 = vld [vmem:[#allocation3 + $0x30] sm:$0xff]
        %v365 = vld [vmem:[#allocation3 + $0x38] sm:$0xff]
        %v366 = vld [vmem:[#allocation3 + $0x40] sm:$0xff]
        %v367 = vld [vmem:[#allocation3 + $0x48] sm:$0xff]
        %v368 = vld [vmem:[#allocation3 + $0x50] sm:$0xff]
        %v369 = vld [vmem:[#allocation3 + $0x58] sm:$0xff]
        %v370 = vld [vmem:[#allocation3 + $0x60] sm:$0xff]
        %v371 = vld [vmem:[#allocation3 + $0x68] sm:$0xff]
        %v372 = vld [vmem:[#allocation3 + $0x70] sm:$0xff]
        %v373 = vld [vmem:[#allocation3 + $0x78] sm:$0xff]
        %v374 = vld [vmem:[#allocation3 + $0x80] sm:$0xff]
        %v375 = vld [vmem:[#allocation3 + $0x88] sm:$0xff]
        %v376 = vld [vmem:[#allocation3 + $0x90] sm:$0xff]
        %v377 = vld [vmem:[#allocation3 + $0x98] sm:$0xff]
        %v378 = vld [vmem:[#allocation3 + $0xa0] sm:$0xff]
        %v379 = vld [vmem:[#allocation3 + $0xa8] sm:$0xff]
        %v380 = vld [vmem:[#allocation3 + $0xb0] sm:$0xff]
        %v381 = vld [vmem:[#allocation3 + $0xb8] sm:$0xff]
        %v382 = vld [vmem:[#allocation3 + $0xc0] sm:$0xff]
        %v383 = vld [vmem:[#allocation3 + $0xc8] sm:$0xff]
        %v384 = vld [vmem:[#allocation3 + $0xd0] sm:$0xff]
        %v385 = vld [vmem:[#allocation3 + $0xd8] sm:$0xff]
        %v386 = vld [vmem:[#allocation3 + $0xe0] sm:$0xff]
        %v387 = vld [vmem:[#allocation3 + $0xe8] sm:$0xff]
        %v388 = vld [vmem:[#allocation3 + $0xf0] sm:$0xff]
        %v389 = vld [vmem:[#allocation3 + $0xf8] sm:$0xff]
        %v390 = vld [vmem:[#allocation3 + $0x100] sm:$0xff]
        %v391 = vld [vmem:[#allocation3 + $0x108] sm:$0xff]
        %v392 = vld [vmem:[#allocation3 + $0x110] sm:$0xff]
        %v393 = vld [vmem:[#allocation3 + $0x118] sm:$0xff]
        %v394 = vld [vmem:[#allocation3 + $0x120] sm:$0xff]
        %v395 = vld [vmem:[#allocation3 + $0x128] sm:$0xff]
        %v396 = vld [vmem:[#allocation3 + $0x130] sm:$0xff]
        %v397 = vld [vmem:[#allocation3 + $0x138] sm:$0xff]
        %v398 = vld [vmem:[#allocation3 + $0x140] sm:$0xff]
        %v399 = vld [vmem:[#allocation3 + $0x148] sm:$0xff]
        %v400 = vld [vmem:[#allocation3 + $0x150] sm:$0xff]
        %v401 = vld [vmem:[#allocation3 + $0x158] sm:$0xff]
        %v402 = vld [vmem:[#allocation3 + $0x160] sm:$0xff]
        %v403 = vld [vmem:[#allocation3 + $0x168] sm:$0xff]
        %v404 = vld [vmem:[#allocation3 + $0x170] sm:$0xff]
        %v405 = vld [vmem:[#allocation3 + $0x178] sm:$0xff]
        %v406 = vld [vmem:[#allocation3 + $0x180] sm:$0xff]
        %v407 = vld [vmem:[#allocation3 + $0x188] sm:$0xff]
        %v408 = vld [vmem:[#allocation3 + $0x190] sm:$0xff]
        %v409 = vld [vmem:[#allocation3 + $0x198] sm:$0xff]
        %v410 = vld [vmem:[#allocation3 + $0x1a0] sm:$0xff]
        %v411 = vld [vmem:[#allocation3 + $0x1a8] sm:$0xff]
        %v412 = vld [vmem:[#allocation3 + $0x1b0] sm:$0xff]
        %v413 = vld [vmem:[#allocation3 + $0x1b8] sm:$0xff]
        %v414 = vld [vmem:[#allocation3 + $0x1c0] sm:$0xff]
        %v415 = vld [vmem:[#allocation3 + $0x1c8] sm:$0xff]
        %v416 = vld [vmem:[#allocation3 + $0x1d0] sm:$0xff]
        %v417 = vld [vmem:[#allocation3 + $0x1d8] sm:$0xff]
        %v418 = vld [vmem:[#allocation3 + $0x1e0] sm:$0xff]
        %v419 = vld [vmem:[#allocation3 + $0x1e8] sm:$0xff]
        %v420 = vld [vmem:[#allocation3 + $0x1f0] sm:$0xff]
        %v421 = vld [vmem:[#allocation3 + $0x1f8] sm:$0xff]
        %v422 = vpack.c.bf16 %v360, %v358
        %v423 = vpack.c.bf16 %v361, %v359
        %v424 = vpack.c.bf16 %v364, %v362
        %v425 = vpack.c.bf16 %v365, %v363
        %v426 = vpack.c.bf16 %v368, %v366
        %v427 = vpack.c.bf16 %v369, %v367
        %v428 = vpack.c.bf16 %v372, %v370
        %v429 = vpack.c.bf16 %v373, %v371
        %v430 = vpack.c.bf16 %v376, %v374
        %v431 = vpack.c.bf16 %v377, %v375
        %v432 = vpack.c.bf16 %v380, %v378
        %v433 = vpack.c.bf16 %v381, %v379
        %v434 = vpack.c.bf16 %v384, %v382
        %v435 = vpack.c.bf16 %v385, %v383
        %v436 = vpack.c.bf16 %v388, %v386
        %v437 = vpack.c.bf16 %v389, %v387
        %v438 = vpack.c.bf16 %v392, %v390
        %v439 = vpack.c.bf16 %v393, %v391
        %v440 = vpack.c.bf16 %v396, %v394
        %v441 = vpack.c.bf16 %v397, %v395
        %v442 = vpack.c.bf16 %v400, %v398
        %v443 = vpack.c.bf16 %v401, %v399
        %v444 = vpack.c.bf16 %v404, %v402
        %v445 = vpack.c.bf16 %v405, %v403
        %v446 = vpack.c.bf16 %v408, %v406
        %v447 = vpack.c.bf16 %v409, %v407
        %v448 = vpack.c.bf16 %v412, %v410
        %v449 = vpack.c.bf16 %v413, %v411
        %v450 = vpack.c.bf16 %v416, %v414
        %v451 = vpack.c.bf16 %v417, %v415
        %v452 = vpack.c.bf16 %v420, %v418
        %v453 = vpack.c.bf16 %v421, %v419
        %v454 = vld [vmem:[%s198] sm:$0xff]
        %v455 = vld [vmem:[%s198 + $0x8] sm:$0xff]
        %v456 = vld [vmem:[%s198 + $0x10] sm:$0xff]
        %v457 = vld [vmem:[%s198 + $0x18] sm:$0xff]
        %v458 = vld [vmem:[%s198 + $0x20] sm:$0xff]
        %v459 = vld [vmem:[%s198 + $0x28] sm:$0xff]
        %v460 = vld [vmem:[%s198 + $0x30] sm:$0xff]
        %v461 = vld [vmem:[%s198 + $0x38] sm:$0xff]
        %v462 = vld [vmem:[%s198 + $0x40] sm:$0xff]
        %v463 = vld [vmem:[%s198 + $0x48] sm:$0xff]
        %v464 = vld [vmem:[%s198 + $0x50] sm:$0xff]
        %v465 = vld [vmem:[%s198 + $0x58] sm:$0xff]
        %v466 = vld [vmem:[%s198 + $0x60] sm:$0xff]
        %v467 = vld [vmem:[%s198 + $0x68] sm:$0xff]
        %v468 = vld [vmem:[%s198 + $0x70] sm:$0xff]
        %v469 = vld [vmem:[%s198 + $0x78] sm:$0xff]
        %v470 = vld [vmem:[%s198 + $0x80] sm:$0xff]
        %v471 = vld [vmem:[%s198 + $0x88] sm:$0xff]
        %v472 = vld [vmem:[%s198 + $0x90] sm:$0xff]
        %v473 = vld [vmem:[%s198 + $0x98] sm:$0xff]
        %v474 = vld [vmem:[%s198 + $0xa0] sm:$0xff]
        %v475 = vld [vmem:[%s198 + $0xa8] sm:$0xff]
        %v476 = vld [vmem:[%s198 + $0xb0] sm:$0xff]
        %v477 = vld [vmem:[%s198 + $0xb8] sm:$0xff]
        %v478 = vld [vmem:[%s198 + $0xc0] sm:$0xff]
        %v479 = vld [vmem:[%s198 + $0xc8] sm:$0xff]
        %v480 = vld [vmem:[%s198 + $0xd0] sm:$0xff]
        %v481 = vld [vmem:[%s198 + $0xd8] sm:$0xff]
        %v482 = vld [vmem:[%s198 + $0xe0] sm:$0xff]
        %v483 = vld [vmem:[%s198 + $0xe8] sm:$0xff]
        %v484 = vld [vmem:[%s198 + $0xf0] sm:$0xff]
        %v485 = vld [vmem:[%s198 + $0xf8] sm:$0xff]
        %v518 = vunpack.c.l.b16 %v454
        %v519 = vunpack.c.h.b16 %v454
        %v520 = vunpack.c.l.b16 %v455
        %v521 = vunpack.c.h.b16 %v455
        %v522 = vunpack.c.l.b16 %v456
        %v523 = vunpack.c.h.b16 %v456
        %v524 = vunpack.c.l.b16 %v457
        %v525 = vunpack.c.h.b16 %v457
        %v526 = vunpack.c.l.b16 %v458
        %v527 = vunpack.c.h.b16 %v458
        %v528 = vunpack.c.l.b16 %v459
        %v529 = vunpack.c.h.b16 %v459
        %v530 = vunpack.c.l.b16 %v460
        %v531 = vunpack.c.h.b16 %v460
        %v532 = vunpack.c.l.b16 %v461
        %v533 = vunpack.c.h.b16 %v461
        %v534 = vunpack.c.l.b16 %v462
        %v535 = vunpack.c.h.b16 %v462
        %v536 = vunpack.c.l.b16 %v463
        %v537 = vunpack.c.h.b16 %v463
        %v538 = vunpack.c.l.b16 %v464
        %v539 = vunpack.c.h.b16 %v464
        %v540 = vunpack.c.l.b16 %v465
        %v541 = vunpack.c.h.b16 %v465
        %v542 = vunpack.c.l.b16 %v466
        %v543 = vunpack.c.h.b16 %v466
        %v544 = vunpack.c.l.b16 %v467
        %v545 = vunpack.c.h.b16 %v467
        %v546 = vunpack.c.l.b16 %v468
        %v547 = vunpack.c.h.b16 %v468
        %v548 = vunpack.c.l.b16 %v469
        %v549 = vunpack.c.h.b16 %v469
        %v550 = vunpack.c.l.b16 %v470
        %v551 = vunpack.c.h.b16 %v470
        %v552 = vunpack.c.l.b16 %v471
        %v553 = vunpack.c.h.b16 %v471
        %v554 = vunpack.c.l.b16 %v472
        %v555 = vunpack.c.h.b16 %v472
        %v556 = vunpack.c.l.b16 %v473
        %v557 = vunpack.c.h.b16 %v473
        %v558 = vunpack.c.l.b16 %v474
        %v559 = vunpack.c.h.b16 %v474
        %v560 = vunpack.c.l.b16 %v475
        %v561 = vunpack.c.h.b16 %v475
        %v562 = vunpack.c.l.b16 %v476
        %v563 = vunpack.c.h.b16 %v476
        %v564 = vunpack.c.l.b16 %v477
        %v565 = vunpack.c.h.b16 %v477
        %v566 = vunpack.c.l.b16 %v478
        %v567 = vunpack.c.h.b16 %v478
        %v568 = vunpack.c.l.b16 %v479
        %v569 = vunpack.c.h.b16 %v479
        %v570 = vunpack.c.l.b16 %v480
        %v571 = vunpack.c.h.b16 %v480
        %v572 = vunpack.c.l.b16 %v481
        %v573 = vunpack.c.h.b16 %v481
        %v574 = vunpack.c.l.b16 %v482
        %v575 = vunpack.c.h.b16 %v482
        %v576 = vunpack.c.l.b16 %v483
        %v577 = vunpack.c.h.b16 %v483
        %v578 = vunpack.c.l.b16 %v484
        %v579 = vunpack.c.h.b16 %v484
        %v580 = vunpack.c.l.b16 %v485
        %v581 = vunpack.c.h.b16 %v485
        %v582 = vpack.c.b16 %v520, %v518
        %v583 = vpack.c.b16 %v521, %v519
        %v584 = vpack.c.b16 %v524, %v522
        %v585 = vpack.c.b16 %v525, %v523
        %v586 = vpack.c.b16 %v528, %v526
        %v587 = vpack.c.b16 %v529, %v527
        %v588 = vpack.c.b16 %v532, %v530
        %v589 = vpack.c.b16 %v533, %v531
        %v590 = vpack.c.b16 %v536, %v534
        %v591 = vpack.c.b16 %v537, %v535
        %v592 = vpack.c.b16 %v540, %v538
        %v593 = vpack.c.b16 %v541, %v539
        %v594 = vpack.c.b16 %v544, %v542
        %v595 = vpack.c.b16 %v545, %v543
        %v596 = vpack.c.b16 %v548, %v546
        %v597 = vpack.c.b16 %v549, %v547
        %v598 = vpack.c.b16 %v552, %v550
        %v599 = vpack.c.b16 %v553, %v551
        %v600 = vpack.c.b16 %v556, %v554
        %v601 = vpack.c.b16 %v557, %v555
        %v602 = vpack.c.b16 %v560, %v558
        %v603 = vpack.c.b16 %v561, %v559
        %v604 = vpack.c.b16 %v564, %v562
        %v605 = vpack.c.b16 %v565, %v563
        %v606 = vpack.c.b16 %v568, %v566
        %v607 = vpack.c.b16 %v569, %v567
        %v608 = vpack.c.b16 %v572, %v570
        %v609 = vpack.c.b16 %v573, %v571
        %v610 = vpack.c.b16 %v576, %v574
        %v611 = vpack.c.b16 %v577, %v575
        %v612 = vpack.c.b16 %v580, %v578
        %v613 = vpack.c.b16 %v581, %v579
        %646 = vmatpush.bf16.msra.mxu0 %v596
        %647 = vmatpush.bf16.msra.mxu0 %v594
        %648 = vmatpush.bf16.msra.mxu0 %v592
        %649 = vmatpush.bf16.msra.mxu0 %v590
        %650 = vmatpush.bf16.msra.mxu0 %v588
        %651 = vmatpush.bf16.msra.mxu0 %v586
        %652 = vmatpush.bf16.msra.mxu0 %v584
        %653 = vmatpush.bf16.msra.mxu0 %v582
        %654 = vmatmul.bf16.gmra.mxu0 %v422
        %v655 = vpop.f32.mrf.mxu0
        %v656 = vadd.f32 0.0, %v655
        %v657 = vpop.f32.mrf.mxu0
        %v658 = vadd.f32 0.0, %v657
        %659 = vmatmul.bf16.gmra.mxu0 %v424
        %v660 = vpop.f32.mrf.mxu0
        %v661 = vadd.f32 0.0, %v660
        %v662 = vpop.f32.mrf.mxu0
        %v663 = vadd.f32 0.0, %v662
        %664 = vmatmul.bf16.gmra.mxu0 %v426
        %v665 = vpop.f32.mrf.mxu0
        %v666 = vadd.f32 0.0, %v665
        %v667 = vpop.f32.mrf.mxu0
        %v668 = vadd.f32 0.0, %v667
        %669 = vmatmul.bf16.gmra.mxu0 %v428
        %v670 = vpop.f32.mrf.mxu0
        %v671 = vadd.f32 0.0, %v670
        %v672 = vpop.f32.mrf.mxu0
        %v673 = vadd.f32 0.0, %v672
        %674 = vmatmul.bf16.gmra.mxu0 %v430
        %v675 = vpop.f32.mrf.mxu0
        %v676 = vadd.f32 0.0, %v675
        %v677 = vpop.f32.mrf.mxu0
        %v678 = vadd.f32 0.0, %v677
        %679 = vmatmul.bf16.gmra.mxu0 %v432
        %v680 = vpop.f32.mrf.mxu0
        %v681 = vadd.f32 0.0, %v680
        %v682 = vpop.f32.mrf.mxu0
        %v683 = vadd.f32 0.0, %v682
        %684 = vmatmul.bf16.gmra.mxu0 %v434
        %v685 = vpop.f32.mrf.mxu0
        %v686 = vadd.f32 0.0, %v685
        %v687 = vpop.f32.mrf.mxu0
        %v688 = vadd.f32 0.0, %v687
        %689 = vmatmul.bf16.gmra.mxu0 %v436
        %v690 = vpop.f32.mrf.mxu0
        %v691 = vadd.f32 0.0, %v690
        %v692 = vpop.f32.mrf.mxu0
        %v693 = vadd.f32 0.0, %v692
        %694 = vmatmul.bf16.gmra.mxu0 %v438
        %v695 = vpop.f32.mrf.mxu0
        %v696 = vadd.f32 0.0, %v695
        %v697 = vpop.f32.mrf.mxu0
        %v698 = vadd.f32 0.0, %v697
        %699 = vmatmul.bf16.gmra.mxu0 %v440
        %v700 = vpop.f32.mrf.mxu0
        %v701 = vadd.f32 0.0, %v700
        %v702 = vpop.f32.mrf.mxu0
        %v703 = vadd.f32 0.0, %v702
        %704 = vmatmul.bf16.gmra.mxu0 %v442
        %v705 = vpop.f32.mrf.mxu0
        %v706 = vadd.f32 0.0, %v705
        %v707 = vpop.f32.mrf.mxu0
        %v708 = vadd.f32 0.0, %v707
        %709 = vmatmul.bf16.gmra.mxu0 %v444
        %v710 = vpop.f32.mrf.mxu0
        %v711 = vadd.f32 0.0, %v710
        %v712 = vpop.f32.mrf.mxu0
        %v713 = vadd.f32 0.0, %v712
        %714 = vmatmul.bf16.gmra.mxu0 %v446
        %v715 = vpop.f32.mrf.mxu0
        %v716 = vadd.f32 0.0, %v715
        %v717 = vpop.f32.mrf.mxu0
        %v718 = vadd.f32 0.0, %v717
        %719 = vmatmul.bf16.gmra.mxu0 %v448
        %v720 = vpop.f32.mrf.mxu0
        %v721 = vadd.f32 0.0, %v720
        %v722 = vpop.f32.mrf.mxu0
        %v723 = vadd.f32 0.0, %v722
        %724 = vmatmul.bf16.gmra.mxu0 %v450
        %v725 = vpop.f32.mrf.mxu0
        %v726 = vadd.f32 0.0, %v725
        %v727 = vpop.f32.mrf.mxu0
        %v728 = vadd.f32 0.0, %v727
        %729 = vmatmul.bf16.gmra.mxu0 %v452
        %v730 = vpop.f32.mrf.mxu0
        %v731 = vadd.f32 0.0, %v730
        %v732 = vpop.f32.mrf.mxu0
        %v733 = vadd.f32 0.0, %v732
        %734 = vdwg.mxu0
        %735 = vmatpush.bf16.msra.mxu0 %v612
        %736 = vmatpush.bf16.msra.mxu0 %v610
        %737 = vmatpush.bf16.msra.mxu0 %v608
        %738 = vmatpush.bf16.msra.mxu0 %v606
        %739 = vmatpush.bf16.msra.mxu0 %v604
        %740 = vmatpush.bf16.msra.mxu0 %v602
        %741 = vmatpush.bf16.msra.mxu0 %v600
        %742 = vmatpush.bf16.msra.mxu0 %v598
        %743 = vmatmul.bf16.gmra.mxu0 %v423
        %v744 = vpop.f32.mrf.mxu0
        %v745 = vadd.f32 %v656, %v744
        %v746 = vpop.f32.mrf.mxu0
        %v747 = vadd.f32 %v658, %v746
        %748 = vmatmul.bf16.gmra.mxu0 %v425
        %v749 = vpop.f32.mrf.mxu0
        %v750 = vadd.f32 %v661, %v749
        %v751 = vpop.f32.mrf.mxu0
        %v752 = vadd.f32 %v663, %v751
        %753 = vmatmul.bf16.gmra.mxu0 %v427
        %v754 = vpop.f32.mrf.mxu0
        %v755 = vadd.f32 %v666, %v754
        %v756 = vpop.f32.mrf.mxu0
        %v757 = vadd.f32 %v668, %v756
        %758 = vmatmul.bf16.gmra.mxu0 %v429
        %v759 = vpop.f32.mrf.mxu0
        %v760 = vadd.f32 %v671, %v759
        %v761 = vpop.f32.mrf.mxu0
        %v762 = vadd.f32 %v673, %v761
        %763 = vmatmul.bf16.gmra.mxu0 %v431
        %v764 = vpop.f32.mrf.mxu0
        %v765 = vadd.f32 %v676, %v764
        %v766 = vpop.f32.mrf.mxu0
        %v767 = vadd.f32 %v678, %v766
        %768 = vmatmul.bf16.gmra.mxu0 %v433
        %v769 = vpop.f32.mrf.mxu0
        %v770 = vadd.f32 %v681, %v769
        %v771 = vpop.f32.mrf.mxu0
        %v772 = vadd.f32 %v683, %v771
        %773 = vmatmul.bf16.gmra.mxu0 %v435
        %v774 = vpop.f32.mrf.mxu0
        %v775 = vadd.f32 %v686, %v774
        %v776 = vpop.f32.mrf.mxu0
        %v777 = vadd.f32 %v688, %v776
        %778 = vmatmul.bf16.gmra.mxu0 %v437
        %v779 = vpop.f32.mrf.mxu0
        %v780 = vadd.f32 %v691, %v779
        %v781 = vpop.f32.mrf.mxu0
        %v782 = vadd.f32 %v693, %v781
        %783 = vmatmul.bf16.gmra.mxu0 %v439
        %v784 = vpop.f32.mrf.mxu0
        %v785 = vadd.f32 %v696, %v784
        %v786 = vpop.f32.mrf.mxu0
        %v787 = vadd.f32 %v698, %v786
        %788 = vmatmul.bf16.gmra.mxu0 %v441
        %v789 = vpop.f32.mrf.mxu0
        %v790 = vadd.f32 %v701, %v789
        %v791 = vpop.f32.mrf.mxu0
        %v792 = vadd.f32 %v703, %v791
        %793 = vmatmul.bf16.gmra.mxu0 %v443
        %v794 = vpop.f32.mrf.mxu0
        %v795 = vadd.f32 %v706, %v794
        %v796 = vpop.f32.mrf.mxu0
        %v797 = vadd.f32 %v708, %v796
        %798 = vmatmul.bf16.gmra.mxu0 %v445
        %v799 = vpop.f32.mrf.mxu0
        %v800 = vadd.f32 %v711, %v799
        %v801 = vpop.f32.mrf.mxu0
        %v802 = vadd.f32 %v713, %v801
        %803 = vmatmul.bf16.gmra.mxu0 %v447
        %v804 = vpop.f32.mrf.mxu0
        %v805 = vadd.f32 %v716, %v804
        %v806 = vpop.f32.mrf.mxu0
        %v807 = vadd.f32 %v718, %v806
        %808 = vmatmul.bf16.gmra.mxu0 %v449
        %v809 = vpop.f32.mrf.mxu0
        %v810 = vadd.f32 %v721, %v809
        %v811 = vpop.f32.mrf.mxu0
        %v812 = vadd.f32 %v723, %v811
        %813 = vmatmul.bf16.gmra.mxu0 %v451
        %v814 = vpop.f32.mrf.mxu0
        %v815 = vadd.f32 %v726, %v814
        %v816 = vpop.f32.mrf.mxu0
        %v817 = vadd.f32 %v728, %v816
        %818 = vmatmul.bf16.gmra.mxu0 %v453
        %v819 = vpop.f32.mrf.mxu0
        %v820 = vadd.f32 %v731, %v819
        %v821 = vpop.f32.mrf.mxu0
        %v822 = vadd.f32 %v733, %v821
        %823 = vdwg.mxu0
        %824 = vmatpush.bf16.msra.mxu0 %v597
        %825 = vmatpush.bf16.msra.mxu0 %v595
        %826 = vmatpush.bf16.msra.mxu0 %v593
        %827 = vmatpush.bf16.msra.mxu0 %v591
        %828 = vmatpush.bf16.msra.mxu0 %v589
        %829 = vmatpush.bf16.msra.mxu0 %v587
        %830 = vmatpush.bf16.msra.mxu0 %v585
        %831 = vmatpush.bf16.msra.mxu0 %v583
        %832 = vmatmul.bf16.gmra.mxu0 %v422
        %v833 = vpop.f32.mrf.mxu0
        %v834 = vadd.f32 0.0, %v833
        %v835 = vpop.f32.mrf.mxu0
        %v836 = vadd.f32 0.0, %v835
        %837 = vmatmul.bf16.gmra.mxu0 %v424
        %v838 = vpop.f32.mrf.mxu0
        %v839 = vadd.f32 0.0, %v838
        %v840 = vpop.f32.mrf.mxu0
        %v841 = vadd.f32 0.0, %v840
        %842 = vmatmul.bf16.gmra.mxu0 %v426
        %v843 = vpop.f32.mrf.mxu0
        %v844 = vadd.f32 0.0, %v843
        %v845 = vpop.f32.mrf.mxu0
        %v846 = vadd.f32 0.0, %v845
        %847 = vmatmul.bf16.gmra.mxu0 %v428
        %v848 = vpop.f32.mrf.mxu0
        %v849 = vadd.f32 0.0, %v848
        %v850 = vpop.f32.mrf.mxu0
        %v851 = vadd.f32 0.0, %v850
        %852 = vmatmul.bf16.gmra.mxu0 %v430
        %v853 = vpop.f32.mrf.mxu0
        %v854 = vadd.f32 0.0, %v853
        %v855 = vpop.f32.mrf.mxu0
        %v856 = vadd.f32 0.0, %v855
        %857 = vmatmul.bf16.gmra.mxu0 %v432
        %v858 = vpop.f32.mrf.mxu0
        %v859 = vadd.f32 0.0, %v858
        %v860 = vpop.f32.mrf.mxu0
        %v861 = vadd.f32 0.0, %v860
        %862 = vmatmul.bf16.gmra.mxu0 %v434
        %v863 = vpop.f32.mrf.mxu0
        %v864 = vadd.f32 0.0, %v863
        %v865 = vpop.f32.mrf.mxu0
        %v866 = vadd.f32 0.0, %v865
        %867 = vmatmul.bf16.gmra.mxu0 %v436
        %v868 = vpop.f32.mrf.mxu0
        %v869 = vadd.f32 0.0, %v868
        %v870 = vpop.f32.mrf.mxu0
        %v871 = vadd.f32 0.0, %v870
        %872 = vmatmul.bf16.gmra.mxu0 %v438
        %v873 = vpop.f32.mrf.mxu0
        %v874 = vadd.f32 0.0, %v873
        %v875 = vpop.f32.mrf.mxu0
        %v876 = vadd.f32 0.0, %v875
        %877 = vmatmul.bf16.gmra.mxu0 %v440
        %v878 = vpop.f32.mrf.mxu0
        %v879 = vadd.f32 0.0, %v878
        %v880 = vpop.f32.mrf.mxu0
        %v881 = vadd.f32 0.0, %v880
        %882 = vmatmul.bf16.gmra.mxu0 %v442
        %v883 = vpop.f32.mrf.mxu0
        %v884 = vadd.f32 0.0, %v883
        %v885 = vpop.f32.mrf.mxu0
        %v886 = vadd.f32 0.0, %v885
        %887 = vmatmul.bf16.gmra.mxu0 %v444
        %v888 = vpop.f32.mrf.mxu0
        %v889 = vadd.f32 0.0, %v888
        %v890 = vpop.f32.mrf.mxu0
        %v891 = vadd.f32 0.0, %v890
        %892 = vmatmul.bf16.gmra.mxu0 %v446
        %v893 = vpop.f32.mrf.mxu0
        %v894 = vadd.f32 0.0, %v893
        %v895 = vpop.f32.mrf.mxu0
        %v896 = vadd.f32 0.0, %v895
        %897 = vmatmul.bf16.gmra.mxu0 %v448
        %v898 = vpop.f32.mrf.mxu0
        %v899 = vadd.f32 0.0, %v898
        %v900 = vpop.f32.mrf.mxu0
        %v901 = vadd.f32 0.0, %v900
        %902 = vmatmul.bf16.gmra.mxu0 %v450
        %v903 = vpop.f32.mrf.mxu0
        %v904 = vadd.f32 0.0, %v903
        %v905 = vpop.f32.mrf.mxu0
        %v906 = vadd.f32 0.0, %v905
        %907 = vmatmul.bf16.gmra.mxu0 %v452
        %v908 = vpop.f32.mrf.mxu0
        %v909 = vadd.f32 0.0, %v908
        %v910 = vpop.f32.mrf.mxu0
        %v911 = vadd.f32 0.0, %v910
        %912 = vdwg.mxu0
        %913 = vmatpush.bf16.msra.mxu0 %v613
        %914 = vmatpush.bf16.msra.mxu0 %v611
        %915 = vmatpush.bf16.msra.mxu0 %v609
        %916 = vmatpush.bf16.msra.mxu0 %v607
        %917 = vmatpush.bf16.msra.mxu0 %v605
        %918 = vmatpush.bf16.msra.mxu0 %v603
        %919 = vmatpush.bf16.msra.mxu0 %v601
        %920 = vmatpush.bf16.msra.mxu0 %v599
        %921 = vmatmul.bf16.gmra.mxu0 %v423
        %v922 = vpop.f32.mrf.mxu0
        %v923 = vadd.f32 %v834, %v922
        %v924 = vpop.f32.mrf.mxu0
        %v925 = vadd.f32 %v836, %v924
        %926 = vmatmul.bf16.gmra.mxu0 %v425
        %v927 = vpop.f32.mrf.mxu0
        %v928 = vadd.f32 %v839, %v927
        %v929 = vpop.f32.mrf.mxu0
        %v930 = vadd.f32 %v841, %v929
        %931 = vmatmul.bf16.gmra.mxu0 %v427
        %v932 = vpop.f32.mrf.mxu0
        %v933 = vadd.f32 %v844, %v932
        %v934 = vpop.f32.mrf.mxu0
        %v935 = vadd.f32 %v846, %v934
        %936 = vmatmul.bf16.gmra.mxu0 %v429
        %v937 = vpop.f32.mrf.mxu0
        %v938 = vadd.f32 %v849, %v937
        %v939 = vpop.f32.mrf.mxu0
        %v940 = vadd.f32 %v851, %v939
        %941 = vmatmul.bf16.gmra.mxu0 %v431
        %v942 = vpop.f32.mrf.mxu0
        %v943 = vadd.f32 %v854, %v942
        %v944 = vpop.f32.mrf.mxu0
        %v945 = vadd.f32 %v856, %v944
        %946 = vmatmul.bf16.gmra.mxu0 %v433
        %v947 = vpop.f32.mrf.mxu0
        %v948 = vadd.f32 %v859, %v947
        %v949 = vpop.f32.mrf.mxu0
        %v950 = vadd.f32 %v861, %v949
        %951 = vmatmul.bf16.gmra.mxu0 %v435
        %v952 = vpop.f32.mrf.mxu0
        %v953 = vadd.f32 %v864, %v952
        %v954 = vpop.f32.mrf.mxu0
        %v955 = vadd.f32 %v866, %v954
        %956 = vmatmul.bf16.gmra.mxu0 %v437
        %v957 = vpop.f32.mrf.mxu0
        %v958 = vadd.f32 %v869, %v957
        %v959 = vpop.f32.mrf.mxu0
        %v960 = vadd.f32 %v871, %v959
        %961 = vmatmul.bf16.gmra.mxu0 %v439
        %v962 = vpop.f32.mrf.mxu0
        %v963 = vadd.f32 %v874, %v962
        %v964 = vpop.f32.mrf.mxu0
        %v965 = vadd.f32 %v876, %v964
        %966 = vmatmul.bf16.gmra.mxu0 %v441
        %v967 = vpop.f32.mrf.mxu0
        %v968 = vadd.f32 %v879, %v967
        %v969 = vpop.f32.mrf.mxu0
        %v970 = vadd.f32 %v881, %v969
        %971 = vmatmul.bf16.gmra.mxu0 %v443
        %v972 = vpop.f32.mrf.mxu0
        %v973 = vadd.f32 %v884, %v972
        %v974 = vpop.f32.mrf.mxu0
        %v975 = vadd.f32 %v886, %v974
        %976 = vmatmul.bf16.gmra.mxu0 %v445
        %v977 = vpop.f32.mrf.mxu0
        %v978 = vadd.f32 %v889, %v977
        %v979 = vpop.f32.mrf.mxu0
        %v980 = vadd.f32 %v891, %v979
        %981 = vmatmul.bf16.gmra.mxu0 %v447
        %v982 = vpop.f32.mrf.mxu0
        %v983 = vadd.f32 %v894, %v982
        %v984 = vpop.f32.mrf.mxu0
        %v985 = vadd.f32 %v896, %v984
        %986 = vmatmul.bf16.gmra.mxu0 %v449
        %v987 = vpop.f32.mrf.mxu0
        %v988 = vadd.f32 %v899, %v987
        %v989 = vpop.f32.mrf.mxu0
        %v990 = vadd.f32 %v901, %v989
        %991 = vmatmul.bf16.gmra.mxu0 %v451
        %v992 = vpop.f32.mrf.mxu0
        %v993 = vadd.f32 %v904, %v992
        %v994 = vpop.f32.mrf.mxu0
        %v995 = vadd.f32 %v906, %v994
        %996 = vmatmul.bf16.gmra.mxu0 %v453
        %v997 = vpop.f32.mrf.mxu0
        %v998 = vadd.f32 %v909, %v997
        %v999 = vpop.f32.mrf.mxu0
        %v1000 = vadd.f32 %v911, %v999
        %1001 = vdwg.mxu0
        %v1002 = vadd.f32 %v294, %v745
        %v1003 = vadd.f32 %v295, %v923
        %v1004 = vadd.f32 %v296, %v747
        %v1005 = vadd.f32 %v297, %v925
        %v1006 = vadd.f32 %v298, %v750
        %v1007 = vadd.f32 %v299, %v928
        %v1008 = vadd.f32 %v300, %v752
        %v1009 = vadd.f32 %v301, %v930
        %v1010 = vadd.f32 %v302, %v755
        %v1011 = vadd.f32 %v303, %v933
        %v1012 = vadd.f32 %v304, %v757
        %v1013 = vadd.f32 %v305, %v935
        %v1014 = vadd.f32 %v306, %v760
        %v1015 = vadd.f32 %v307, %v938
        %v1016 = vadd.f32 %v308, %v762
        %v1017 = vadd.f32 %v309, %v940
        %v1018 = vadd.f32 %v310, %v765
        %v1019 = vadd.f32 %v311, %v943
        %v1020 = vadd.f32 %v312, %v767
        %v1021 = vadd.f32 %v313, %v945
        %v1022 = vadd.f32 %v314, %v770
        %v1023 = vadd.f32 %v315, %v948
        %v1024 = vadd.f32 %v316, %v772
        %v1025 = vadd.f32 %v317, %v950
        %v1026 = vadd.f32 %v318, %v775
        %v1027 = vadd.f32 %v319, %v953
        %v1028 = vadd.f32 %v320, %v777
        %v1029 = vadd.f32 %v321, %v955
        %v1030 = vadd.f32 %v322, %v780
        %v1031 = vadd.f32 %v323, %v958
        %v1032 = vadd.f32 %v324, %v782
        %v1033 = vadd.f32 %v325, %v960
        %v1034 = vadd.f32 %v326, %v785
        %v1035 = vadd.f32 %v327, %v963
        %v1036 = vadd.f32 %v328, %v787
        %v1037 = vadd.f32 %v329, %v965
        %v1038 = vadd.f32 %v330, %v790
        %v1039 = vadd.f32 %v331, %v968
        %v1040 = vadd.f32 %v332, %v792
        %v1041 = vadd.f32 %v333, %v970
        %v1042 = vadd.f32 %v334, %v795
        %v1043 = vadd.f32 %v335, %v973
        %v1044 = vadd.f32 %v336, %v797
        %v1045 = vadd.f32 %v337, %v975
        %v1046 = vadd.f32 %v338, %v800
        %v1047 = vadd.f32 %v339, %v978
        %v1048 = vadd.f32 %v340, %v802
        %v1049 = vadd.f32 %v341, %v980
        %v1050 = vadd.f32 %v342, %v805
        %v1051 = vadd.f32 %v343, %v983
        %v1052 = vadd.f32 %v344, %v807
        %v1053 = vadd.f32 %v345, %v985
        %v1054 = vadd.f32 %v346, %v810
        %v1055 = vadd.f32 %v347, %v988
        %v1056 = vadd.f32 %v348, %v812
        %v1057 = vadd.f32 %v349, %v990
        %v1058 = vadd.f32 %v350, %v815
        %v1059 = vadd.f32 %v351, %v993
        %v1060 = vadd.f32 %v352, %v817
        %v1061 = vadd.f32 %v353, %v995
        %v1062 = vadd.f32 %v354, %v820
        %v1063 = vadd.f32 %v355, %v998
        %v1064 = vadd.f32 %v356, %v822
        %v1065 = vadd.f32 %v357, %v1000
        %1066 = vst [vmem:[#allocation2] sm:$0xff] %v1002
        %1067 = vst [vmem:[#allocation2 + $0x8] sm:$0xff] %v1003
        %1068 = vst [vmem:[#allocation2 + $0x10] sm:$0xff] %v1004
        %1069 = vst [vmem:[#allocation2 + $0x18] sm:$0xff] %v1005
        %1070 = vst [vmem:[#allocation2 + $0x20] sm:$0xff] %v1006
        %1071 = vst [vmem:[#allocation2 + $0x28] sm:$0xff] %v1007
        %1072 = vst [vmem:[#allocation2 + $0x30] sm:$0xff] %v1008
        %1073 = vst [vmem:[#allocation2 + $0x38] sm:$0xff] %v1009
        %1074 = vst [vmem:[#allocation2 + $0x40] sm:$0xff] %v1010
        %1075 = vst [vmem:[#allocation2 + $0x48] sm:$0xff] %v1011
        %1076 = vst [vmem:[#allocation2 + $0x50] sm:$0xff] %v1012
        %1077 = vst [vmem:[#allocation2 + $0x58] sm:$0xff] %v1013
        %1078 = vst [vmem:[#allocation2 + $0x60] sm:$0xff] %v1014
        %1079 = vst [vmem:[#allocation2 + $0x68] sm:$0xff] %v1015
        %1080 = vst [vmem:[#allocation2 + $0x70] sm:$0xff] %v1016
        %1081 = vst [vmem:[#allocation2 + $0x78] sm:$0xff] %v1017
        %1082 = vst [vmem:[#allocation2 + $0x80] sm:$0xff] %v1018
        %1083 = vst [vmem:[#allocation2 + $0x88] sm:$0xff] %v1019
        %1084 = vst [vmem:[#allocation2 + $0x90] sm:$0xff] %v1020
        %1085 = vst [vmem:[#allocation2 + $0x98] sm:$0xff] %v1021
        %1086 = vst [vmem:[#allocation2 + $0xa0] sm:$0xff] %v1022
        %1087 = vst [vmem:[#allocation2 + $0xa8] sm:$0xff] %v1023
        %1088 = vst [vmem:[#allocation2 + $0xb0] sm:$0xff] %v1024
        %1089 = vst [vmem:[#allocation2 + $0xb8] sm:$0xff] %v1025
        %1090 = vst [vmem:[#allocation2 + $0xc0] sm:$0xff] %v1026
        %1091 = vst [vmem:[#allocation2 + $0xc8] sm:$0xff] %v1027
        %1092 = vst [vmem:[#allocation2 + $0xd0] sm:$0xff] %v1028
        %1093 = vst [vmem:[#allocation2 + $0xd8] sm:$0xff] %v1029
        %1094 = vst [vmem:[#allocation2 + $0xe0] sm:$0xff] %v1030
        %1095 = vst [vmem:[#allocation2 + $0xe8] sm:$0xff] %v1031
        %1096 = vst [vmem:[#allocation2 + $0xf0] sm:$0xff] %v1032
        %1097 = vst [vmem:[#allocation2 + $0xf8] sm:$0xff] %v1033
        %1098 = vst [vmem:[#allocation2 + $0x100] sm:$0xff] %v1034
        %1099 = vst [vmem:[#allocation2 + $0x108] sm:$0xff] %v1035
        %1100 = vst [vmem:[#allocation2 + $0x110] sm:$0xff] %v1036
        %1101 = vst [vmem:[#allocation2 + $0x118] sm:$0xff] %v1037
        %1102 = vst [vmem:[#allocation2 + $0x120] sm:$0xff] %v1038
        %1103 = vst [vmem:[#allocation2 + $0x128] sm:$0xff] %v1039
        %1104 = vst [vmem:[#allocation2 + $0x130] sm:$0xff] %v1040
        %1105 = vst [vmem:[#allocation2 + $0x138] sm:$0xff] %v1041
        %1106 = vst [vmem:[#allocation2 + $0x140] sm:$0xff] %v1042
        %1107 = vst [vmem:[#allocation2 + $0x148] sm:$0xff] %v1043
        %1108 = vst [vmem:[#allocation2 + $0x150] sm:$0xff] %v1044
        %1109 = vst [vmem:[#allocation2 + $0x158] sm:$0xff] %v1045
        %1110 = vst [vmem:[#allocation2 + $0x160] sm:$0xff] %v1046
        %1111 = vst [vmem:[#allocation2 + $0x168] sm:$0xff] %v1047
        %1112 = vst [vmem:[#allocation2 + $0x170] sm:$0xff] %v1048
        %1113 = vst [vmem:[#allocation2 + $0x178] sm:$0xff] %v1049
        %1114 = vst [vmem:[#allocation2 + $0x180] sm:$0xff] %v1050
        %1115 = vst [vmem:[#allocation2 + $0x188] sm:$0xff] %v1051
        %1116 = vst [vmem:[#allocation2 + $0x190] sm:$0xff] %v1052
        %1117 = vst [vmem:[#allocation2 + $0x198] sm:$0xff] %v1053
        %1118 = vst [vmem:[#allocation2 + $0x1a0] sm:$0xff] %v1054
        %1119 = vst [vmem:[#allocation2 + $0x1a8] sm:$0xff] %v1055
        %1120 = vst [vmem:[#allocation2 + $0x1b0] sm:$0xff] %v1056
        %1121 = vst [vmem:[#allocation2 + $0x1b8] sm:$0xff] %v1057
        %1122 = vst [vmem:[#allocation2 + $0x1c0] sm:$0xff] %v1058
        %1123 = vst [vmem:[#allocation2 + $0x1c8] sm:$0xff] %v1059
        %1124 = vst [vmem:[#allocation2 + $0x1d0] sm:$0xff] %v1060
        %1125 = vst [vmem:[#allocation2 + $0x1d8] sm:$0xff] %v1061
        %1126 = vst [vmem:[#allocation2 + $0x1e0] sm:$0xff] %v1062
        %1127 = vst [vmem:[#allocation2 + $0x1e8] sm:$0xff] %v1063
        %1128 = vst [vmem:[#allocation2 + $0x1f0] sm:$0xff] %v1064
        %1129 = vst [vmem:[#allocation2 + $0x1f8] sm:$0xff] %v1065
        // Predicated region
        $region41: #{tpu_custom_call.1} parent=27 // pred_check
          %p1130 = pneg %p226
        $region42: #{tpu_custom_call.1} parent=27 // pred_check_branch
          %1132 = sbr.rel (%p1130) target = $region44
        $region43: #{tpu_custom_call.1} parent=27 // pred_region
          %v1133 = vld [vmem:[#allocation2] sm:$0xff]
          %v1134 = vld [vmem:[#allocation2 + $0x8] sm:$0xff]
          %v1135 = vld [vmem:[#allocation2 + $0x10] sm:$0xff]
          %v1136 = vld [vmem:[#allocation2 + $0x18] sm:$0xff]
          %v1137 = vld [vmem:[#allocation2 + $0x20] sm:$0xff]
          %v1138 = vld [vmem:[#allocation2 + $0x28] sm:$0xff]
          %v1139 = vld [vmem:[#allocation2 + $0x30] sm:$0xff]
          %v1140 = vld [vmem:[#allocation2 + $0x38] sm:$0xff]
          %v1141 = vld [vmem:[#allocation2 + $0x40] sm:$0xff]
          %v1142 = vld [vmem:[#allocation2 + $0x48] sm:$0xff]
          %v1143 = vld [vmem:[#allocation2 + $0x50] sm:$0xff]
          %v1144 = vld [vmem:[#allocation2 + $0x58] sm:$0xff]
          %v1145 = vld [vmem:[#allocation2 + $0x60] sm:$0xff]
          %v1146 = vld [vmem:[#allocation2 + $0x68] sm:$0xff]
          %v1147 = vld [vmem:[#allocation2 + $0x70] sm:$0xff]
          %v1148 = vld [vmem:[#allocation2 + $0x78] sm:$0xff]
          %v1149 = vld [vmem:[#allocation2 + $0x80] sm:$0xff]
          %v1150 = vld [vmem:[#allocation2 + $0x88] sm:$0xff]
          %v1151 = vld [vmem:[#allocation2 + $0x90] sm:$0xff]
          %v1152 = vld [vmem:[#allocation2 + $0x98] sm:$0xff]
          %v1153 = vld [vmem:[#allocation2 + $0xa0] sm:$0xff]
          %v1154 = vld [vmem:[#allocation2 + $0xa8] sm:$0xff]
          %v1155 = vld [vmem:[#allocation2 + $0xb0] sm:$0xff]
          %v1156 = vld [vmem:[#allocation2 + $0xb8] sm:$0xff]
          %v1157 = vld [vmem:[#allocation2 + $0xc0] sm:$0xff]
          %v1158 = vld [vmem:[#allocation2 + $0xc8] sm:$0xff]
          %v1159 = vld [vmem:[#allocation2 + $0xd0] sm:$0xff]
          %v1160 = vld [vmem:[#allocation2 + $0xd8] sm:$0xff]
          %v1161 = vld [vmem:[#allocation2 + $0xe0] sm:$0xff]
          %v1162 = vld [vmem:[#allocation2 + $0xe8] sm:$0xff]
          %v1163 = vld [vmem:[#allocation2 + $0xf0] sm:$0xff]
          %v1164 = vld [vmem:[#allocation2 + $0xf8] sm:$0xff]
          %v1165 = vld [vmem:[#allocation2 + $0x100] sm:$0xff]
          %v1166 = vld [vmem:[#allocation2 + $0x108] sm:$0xff]
          %v1167 = vld [vmem:[#allocation2 + $0x110] sm:$0xff]
          %v1168 = vld [vmem:[#allocation2 + $0x118] sm:$0xff]
          %v1169 = vld [vmem:[#allocation2 + $0x120] sm:$0xff]
          %v1170 = vld [vmem:[#allocation2 + $0x128] sm:$0xff]
          %v1171 = vld [vmem:[#allocation2 + $0x130] sm:$0xff]
          %v1172 = vld [vmem:[#allocation2 + $0x138] sm:$0xff]
          %v1173 = vld [vmem:[#allocation2 + $0x140] sm:$0xff]
          %v1174 = vld [vmem:[#allocation2 + $0x148] sm:$0xff]
          %v1175 = vld [vmem:[#allocation2 + $0x150] sm:$0xff]
          %v1176 = vld [vmem:[#allocation2 + $0x158] sm:$0xff]
          %v1177 = vld [vmem:[#allocation2 + $0x160] sm:$0xff]
          %v1178 = vld [vmem:[#allocation2 + $0x168] sm:$0xff]
          %v1179 = vld [vmem:[#allocation2 + $0x170] sm:$0xff]
          %v1180 = vld [vmem:[#allocation2 + $0x178] sm:$0xff]
          %v1181 = vld [vmem:[#allocation2 + $0x180] sm:$0xff]
          %v1182 = vld [vmem:[#allocation2 + $0x188] sm:$0xff]
          %v1183 = vld [vmem:[#allocation2 + $0x190] sm:$0xff]
          %v1184 = vld [vmem:[#allocation2 + $0x198] sm:$0xff]
          %v1185 = vld [vmem:[#allocation2 + $0x1a0] sm:$0xff]
          %v1186 = vld [vmem:[#allocation2 + $0x1a8] sm:$0xff]
          %v1187 = vld [vmem:[#allocation2 + $0x1b0] sm:$0xff]
          %v1188 = vld [vmem:[#allocation2 + $0x1b8] sm:$0xff]
          %v1189 = vld [vmem:[#allocation2 + $0x1c0] sm:$0xff]
          %v1190 = vld [vmem:[#allocation2 + $0x1c8] sm:$0xff]
          %v1191 = vld [vmem:[#allocation2 + $0x1d0] sm:$0xff]
          %v1192 = vld [vmem:[#allocation2 + $0x1d8] sm:$0xff]
          %v1193 = vld [vmem:[#allocation2 + $0x1e0] sm:$0xff]
          %v1194 = vld [vmem:[#allocation2 + $0x1e8] sm:$0xff]
          %v1195 = vld [vmem:[#allocation2 + $0x1f0] sm:$0xff]
          %v1196 = vld [vmem:[#allocation2 + $0x1f8] sm:$0xff]
          %v1197 = vpack.c.bf16 %v1134, %v1133
          %v1198 = vpack.c.bf16 %v1136, %v1135
          %v1199 = vpack.c.bf16 %v1138, %v1137
          %v1200 = vpack.c.bf16 %v1140, %v1139
          %v1201 = vpack.c.bf16 %v1142, %v1141
          %v1202 = vpack.c.bf16 %v1144, %v1143
          %v1203 = vpack.c.bf16 %v1146, %v1145
          %v1204 = vpack.c.bf16 %v1148, %v1147
          %v1205 = vpack.c.bf16 %v1150, %v1149
          %v1206 = vpack.c.bf16 %v1152, %v1151
          %v1207 = vpack.c.bf16 %v1154, %v1153
          %v1208 = vpack.c.bf16 %v1156, %v1155
          %v1209 = vpack.c.bf16 %v1158, %v1157
          %v1210 = vpack.c.bf16 %v1160, %v1159
          %v1211 = vpack.c.bf16 %v1162, %v1161
          %v1212 = vpack.c.bf16 %v1164, %v1163
          %v1213 = vpack.c.bf16 %v1166, %v1165
          %v1214 = vpack.c.bf16 %v1168, %v1167
          %v1215 = vpack.c.bf16 %v1170, %v1169
          %v1216 = vpack.c.bf16 %v1172, %v1171
          %v1217 = vpack.c.bf16 %v1174, %v1173
          %v1218 = vpack.c.bf16 %v1176, %v1175
          %v1219 = vpack.c.bf16 %v1178, %v1177
          %v1220 = vpack.c.bf16 %v1180, %v1179
          %v1221 = vpack.c.bf16 %v1182, %v1181
          %v1222 = vpack.c.bf16 %v1184, %v1183
          %v1223 = vpack.c.bf16 %v1186, %v1185
          %v1224 = vpack.c.bf16 %v1188, %v1187
          %v1225 = vpack.c.bf16 %v1190, %v1189
          %v1226 = vpack.c.bf16 %v1192, %v1191
          %v1227 = vpack.c.bf16 %v1194, %v1193
          %v1228 = vpack.c.bf16 %v1196, %v1195
          %1229 = vst [vmem:[%s219] sm:$0xff] %v1197
          %1230 = vst [vmem:[%s219 + $0x8] sm:$0xff] %v1198
          %1231 = vst [vmem:[%s219 + $0x10] sm:$0xff] %v1199
          %1232 = vst [vmem:[%s219 + $0x18] sm:$0xff] %v1200
          %1233 = vst [vmem:[%s219 + $0x20] sm:$0xff] %v1201
          %1234 = vst [vmem:[%s219 + $0x28] sm:$0xff] %v1202
          %1235 = vst [vmem:[%s219 + $0x30] sm:$0xff] %v1203
          %1236 = vst [vmem:[%s219 + $0x38] sm:$0xff] %v1204
          %1237 = vst [vmem:[%s219 + $0x40] sm:$0xff] %v1205
          %1238 = vst [vmem:[%s219 + $0x48] sm:$0xff] %v1206
          %1239 = vst [vmem:[%s219 + $0x50] sm:$0xff] %v1207
          %1240 = vst [vmem:[%s219 + $0x58] sm:$0xff] %v1208
          %1241 = vst [vmem:[%s219 + $0x60] sm:$0xff] %v1209
          %1242 = vst [vmem:[%s219 + $0x68] sm:$0xff] %v1210
          %1243 = vst [vmem:[%s219 + $0x70] sm:$0xff] %v1211
          %1244 = vst [vmem:[%s219 + $0x78] sm:$0xff] %v1212
          %1245 = vst [vmem:[%s219 + $0x80] sm:$0xff] %v1213
          %1246 = vst [vmem:[%s219 + $0x88] sm:$0xff] %v1214
          %1247 = vst [vmem:[%s219 + $0x90] sm:$0xff] %v1215
          %1248 = vst [vmem:[%s219 + $0x98] sm:$0xff] %v1216
          %1249 = vst [vmem:[%s219 + $0xa0] sm:$0xff] %v1217
          %1250 = vst [vmem:[%s219 + $0xa8] sm:$0xff] %v1218
          %1251 = vst [vmem:[%s219 + $0xb0] sm:$0xff] %v1219
          %1252 = vst [vmem:[%s219 + $0xb8] sm:$0xff] %v1220
          %1253 = vst [vmem:[%s219 + $0xc0] sm:$0xff] %v1221
          %1254 = vst [vmem:[%s219 + $0xc8] sm:$0xff] %v1222
          %1255 = vst [vmem:[%s219 + $0xd0] sm:$0xff] %v1223
          %1256 = vst [vmem:[%s219 + $0xd8] sm:$0xff] %v1224
          %1257 = vst [vmem:[%s219 + $0xe0] sm:$0xff] %v1225
          %1258 = vst [vmem:[%s219 + $0xe8] sm:$0xff] %v1226
          %1259 = vst [vmem:[%s219 + $0xf0] sm:$0xff] %v1227
          %1260 = vst [vmem:[%s219 + $0xf8] sm:$0xff] %v1228
        $region44: #{tpu_custom_call.1} parent=27 // pred_fallthru
          _
        %s1261 = sand.u32 %s105, 1
        %s1262 = scalar_lea.sflag [#allocation5], %s1261
        %s1263 = sand.u32 %s105, 1
        %s1264 = smul.addr %s1263, 256
        %s1265 = scalar_lea.vmem [#allocation8], %s1264
        // Predicated region
        $region45: #{tpu_custom_call.1} parent=27 // pred_check
          %p1266 = pneg %p115
        $region46: #{tpu_custom_call.1} parent=27 // pred_check_branch
          %1268 = sbr.rel (%p1266) target = $region48
        $region47: #{tpu_custom_call.1} parent=27 // pred_region
          %s1269 = smul.u32 32, %s25
          %s1270 = smul.u32 2, %s26
          %1272 = vsyncadd %s1262, 0
          %s1273 = smul.addr %s1269, 6
          %s1274 = sadd.s32 %s1270, %s1273
          %s1275 = smul.addr %s1274, 4
          %s1276 = scalar_lea.hbm %s2, %s1275
          %s1277 = sshll.u32 %s1265, 4
          %s1278 = int_to_ptr.vmem [resolvable:$true] %s1277
          %s1279 = sshll.u32 %s1276, 4
          %s1280 = int_to_ptr.hbm [resolvable:$true] %s1279
          %1285 = dma.vmem_to_hbm [thread:$0]  %s1278, 4096, %s1280, %s1262, 128, 384, 8
        $region48: #{tpu_custom_call.1} parent=27 // pred_fallthru
          _
      $region28: #{tpu_custom_call.1} parent=5 // pred_fallthru
        _
      %p1286 = scmp.le.s32.totalorder 2, %s15
      // Predicated region
      $region49: #{tpu_custom_call.1} parent=5 // pred_check
        %p1287 = pneg %p1286
      $region50: #{tpu_custom_call.1} parent=5 // pred_check_branch
        %1289 = sbr.rel (%p1287) target = $region52
      $region51: #{tpu_custom_call.1} parent=5 // pred_region
        %s1290 = ssub.s32 %s15, 2
        // Predicated region
        $region53: #{tpu_custom_call.1} parent=51 // pred_check
          %p1291 = pneg %p121
        $region54: #{tpu_custom_call.1} parent=51 // pred_check_branch
          %1293 = sbr.rel (%p1291) target = $region56
        $region55: #{tpu_custom_call.1} parent=51 // pred_region
          %s1294 = sand.u32 %s106, 1
          %s1295 = scalar_lea.sflag [#allocation5], %s1294
          %s1296 = sand.u32 %s106, 1
          %s1297 = smul.addr %s1296, 256
          %s1298 = scalar_lea.vmem [#allocation8], %s1297
          %1300 = dma.done %s1295, 4096
        $region56: #{tpu_custom_call.1} parent=51 // pred_fallthru
          _
      $region52: #{tpu_custom_call.1} parent=5 // pred_fallthru
        _
    $region6: #{tpu_custom_call.1} parent=1 // loop_footer
      %s19 = sadd.s32 1, %s15
    $region7: #{tpu_custom_call.1} parent=1 // loop_footer_branch
      %14 = sbr.rel target = $region3
    $region8: #{tpu_custom_call.1} parent=1 // loop_exit
      _
    %1301 = vsyncpa [#allocation4], 1
    %s1302 = scalar_lea.sflag [#allocation4], 1
    %1303 = vsyncpa %s1302, 1
    %1304 = vsyncpa [#allocation7], 1
    %s1305 = scalar_lea.sflag [#allocation7], 1
    %1306 = vsyncpa %s1305, 1
    %1307 = vsyncpa [#allocation5], 1
    %s1308 = scalar_lea.sflag [#allocation5], 1
    %1309 = vsyncpa %s1308, 1

</llo_original>
